<compile_context>
chip_gen: v6e
topology: v6e:2x2x1
jax: 0.10.0
libtpu: 0.0.40
codegen_flags: <defaults>
</compile_context>

<pallas_src>
import functools

import jax
import jax.numpy as jnp
import numpy as np
from jax.experimental import pallas as pl
from jax.experimental.pallas import tpu as pltpu


# ----------------------------- Pallas kernel --------------------------------
def _mlgcn_kernel(O, TBV,
                  xa_ref, xb_ref, biga_ref, arst_ref, w6_ref, fcwb_ref,
                  fcbw_ref, ps_ref,
                  out_ref, wsc_ref, bias_ref):
    """One grid step = one (sample n, frame-tile t) pair.

    xa_ref   : (C, T*V)        full sample, used only for the squeeze (t == 0)
    xb_ref   : (C, TB*V)       current frame tile
    biga_ref : (TB*V, 5*TB*V)  block-diag(A_s) concatenated over the 5 subsets
    arst_ref : (T*V, 5)        per-subset adjacency row-sums / (T*V), tiled
    w6_ref   : (6*O, C)        [W_d0; W_d1; W_d2; W_part; W_body; W_down_eff]
    fcwb_ref : (D, O+1)        [fc.weight | fc.bias_eff]
    fcbw_ref : (3*O, D)        fc_branch weights stacked
    ps_ref   : (O, 8)          [b_joint b_part b_body bn_scale bias_shift
                                fcbr_b0 fcbr_b1 fcbr_b2]
    out_ref  : (O, TB*V)
    wsc_ref  : (6*O, C) VMEM   attention/BN-scaled weights (per-sample carry)
    bias_ref : (O, 1)   VMEM   folded bias column (per-sample carry)
    """
    f32 = jnp.float32

    # ---- squeeze / branch attention: once per sample (first frame tile) ----
    @pl.when(pl.program_id(1) == 0)
    def _squeeze():
        xa = xa_ref[...]                                            # (C, T*V)
        w6 = w6_ref[...]                                            # (6O, C)
        # Pooled stats: R[c, s] = mean_{t,v} x[c,t,v] * rowsum(A_s)[v]
        # (exact closed form of mean_{t,v}(W_s (x A_s)) by linearity).
        R = jnp.dot(xa, arst_ref[...], preferred_element_type=f32)  # (C, 5)
        xsum = jnp.zeros((O, 1), f32)
        for s in range(5):
            xsum = xsum + jnp.dot(w6[s * O:(s + 1) * O, :], R[:, s:s + 1],
                                  preferred_element_type=f32)       # (O, 1)
        fcwb = fcwb_ref[...]                                        # (D, O+1)
        temp = (jnp.dot(fcwb[:, :O], xsum, preferred_element_type=f32)
                + fcwb[:, O:O + 1])                                 # (D, 1)
        fcbw = fcbw_ref[...]                                        # (3O, D)
        lg = jnp.concatenate(
            [jnp.dot(fcbw[i * O:(i + 1) * O, :], temp,
                     preferred_element_type=f32) for i in range(3)],
            axis=1) + ps_ref[:, 5:8]                                # (O, 3)
        m = jnp.max(lg, axis=1, keepdims=True)
        e = jnp.exp(lg - m)
        att = e / jnp.sum(e, axis=1, keepdims=True)                 # (O, 3)
        attbn = att * ps_ref[:, 3:4]                                # fold BN scale
        # folded bias: bn_scale*(att . branch biases) + bn_shift + down bias
        bias_ref[...] = (jnp.sum(attbn * ps_ref[:, 0:3], axis=1, keepdims=True)
                         + ps_ref[:, 4:5])                          # (O, 1)
        scale6 = jnp.concatenate(
            [attbn[:, 0:1], attbn[:, 0:1], attbn[:, 0:1],
             attbn[:, 1:2], attbn[:, 2:3], jnp.ones((O, 1), f32)], axis=0)
        wsc_ref[...] = w6 * scale6                                  # (6O, C)

    # ---- main pass for this frame tile (lane-dense, all T in one GEMM) ----
    xb = xb_ref[...]                                                # (C, TB*V)
    # single graph GEMM for all 5 adjacency subsets
    z = jnp.dot(xb, biga_ref[...], preferred_element_type=f32)      # (C, 5*TB*V)
    wsc = wsc_ref[...]                                              # (6O, C)
    # residual branch (down conv + BN folded; adjacency = identity)
    acc = jnp.dot(wsc[5 * O:6 * O, :], xb, preferred_element_type=f32)
    for s in range(5):
        acc = acc + jnp.dot(wsc[s * O:(s + 1) * O, :],
                            z[:, s * TBV:(s + 1) * TBV],
                            preferred_element_type=f32)             # (O, TB*V)
    out_ref[...] = jnp.maximum(acc + bias_ref[...], 0.0)


# ------------------------------- wrapper -------------------------------------
def _pick_tb(T, V, max_lanes=512):
    tb = 1
    for d in range(1, T + 1):
        if T % d == 0 and d * V <= max_lanes:
            tb = d
    return tb


def mlgcn_forward(x, params):
    N, C, T, V = x.shape
    O = params["pslab"].shape[0]
    D = params["fcwb"].shape[0]
    TB = _pick_tb(T, V)
    num_tb = T // TB
    TBV = TB * V
    TV = T * V

    anorm = params["anorm"]                                          # (5, V, V)
    eye_tb = jnp.eye(TB, dtype=jnp.float32)
    # block-diagonal adjacency per subset, concatenated over the 5 subsets
    biga = jnp.concatenate(
        [jnp.kron(eye_tb, anorm[s]) for s in range(5)], axis=1)      # (TBV, 5*TBV)
    rowsum = jnp.sum(anorm, axis=2).T                                # (V, 5)
    arst = jnp.tile(rowsum, (T, 1)) * (1.0 / float(T * V))           # (TV, 5)

    xa = x.reshape(N, C, TV)            # lane-dense full-sample view (squeeze)
    xb = x.reshape(N, C, num_tb, TBV)   # lane-dense frame-tile view (main)

    kernel = functools.partial(_mlgcn_kernel, O, TBV)

    grid_spec = pltpu.PrefetchScalarGridSpec(
        num_scalar_prefetch=0,
        grid=(N, num_tb),
        in_specs=[
            pl.BlockSpec((None, C, TV), lambda n, t: (n, 0, 0)),          # xa
            pl.BlockSpec((None, C, None, TBV), lambda n, t: (n, 0, t, 0)),  # xb
            pl.BlockSpec((TBV, 5 * TBV), lambda n, t: (0, 0)),            # biga
            pl.BlockSpec((TV, 5), lambda n, t: (0, 0)),                   # arst
            pl.BlockSpec((6 * O, C), lambda n, t: (0, 0)),                # w6
            pl.BlockSpec((D, O + 1), lambda n, t: (0, 0)),                # fcwb
            pl.BlockSpec((3 * O, D), lambda n, t: (0, 0)),                # fcbw
            pl.BlockSpec((O, 8), lambda n, t: (0, 0)),                    # pslab
        ],
        out_specs=pl.BlockSpec((None, O, None, TBV), lambda n, t: (n, 0, t, 0)),
        scratch_shapes=[pltpu.VMEM((6 * O, C), jnp.float32),
                        pltpu.VMEM((O, 1), jnp.float32)],
    )

    out = pl.pallas_call(
        kernel,
        out_shape=jax.ShapeDtypeStruct((N, O, num_tb, TBV), jnp.float32),
        grid_spec=grid_spec,
        compiler_params=pltpu.CompilerParams(
            dimension_semantics=("parallel", "arbitrary")),
    )(xa, xb, biga, arst, params["w6"], params["fcwb"], params["fcbw"],
      params["pslab"])
    return out.reshape(N, O, T, V)


# --------------------------- host-side glue ----------------------------------
def norm_col(M):
    # torch: D_12 = eye(V) * (sum(A, 0) + 1e-3)^-1 ;  A @ D_12 == column normalize
    d = 1.0 / (jnp.sum(M, axis=0) + 0.001)
    return M * d[None, :]


def fold_params(rp, eps=1e-5):
    anorm = jnp.stack([norm_col(rp["A"][i] + rp["PA"][i]) for i in range(3)]
                      + [norm_col(rp["Gp"]), norm_col(rp["Gb"])])      # (5, V, V)
    ds = rp["dbn_g"] / jnp.sqrt(rp["dbn_rv"] + eps)
    dw_eff = ds[:, None] * rp["down_w"]
    db_eff = ds * (rp["down_b"] - rp["dbn_rm"]) + rp["dbn_b"]
    bn_scale = rp["bn_g"] / jnp.sqrt(rp["bn_rv"] + eps)
    bn_shift = rp["bn_b"] - rp["bn_rm"] * bn_scale

    w6 = jnp.concatenate([rp["convd_w"][0], rp["convd_w"][1], rp["convd_w"][2],
                          rp["convp_w"], rp["convb_w"], dw_eff], axis=0)  # (6O, C)

    bj = rp["convd_b"].sum(axis=0)
    bp = rp["convp_b"]
    bb = rp["convb_b"]
    pslab = jnp.stack([bj, bp, bb, bn_scale, bn_shift + db_eff,
                       rp["fcbr_b"][0], rp["fcbr_b"][1], rp["fcbr_b"][2]],
                      axis=1)                                            # (O, 8)

    fcb_eff = rp["fc_b"] + rp["fc_w"] @ (bj + bp + bb)    # fold pooled-bias term
    fcwb = jnp.concatenate([rp["fc_w"], fcb_eff[:, None]], axis=1)       # (D, O+1)
    fcbw = jnp.concatenate([rp["fcbr_w"][0], rp["fcbr_w"][1],
                            rp["fcbr_w"][2]], axis=0)                    # (3O, D)
    return dict(anorm=anorm, w6=w6, pslab=pslab, fcwb=fcwb, fcbw=fcbw)


# ------------------------- pure-JAX reference --------------------------------
def ref_forward(x, rp, eps=1e-5):
    hp = jax.lax.Precision.HIGHEST
    N, C, T, V = x.shape
    x2 = x.reshape(N, C * T, V)
    Ae = rp["A"] + rp["PA"]
    y = None
    for i in range(3):
        A1 = norm_col(Ae[i])
        z = jnp.matmul(x2, A1, precision=hp).reshape(N, C, T, V)
        z = (jnp.einsum("oc,nctv->notv", rp["convd_w"][i], z, precision=hp)
             + rp["convd_b"][i][None, :, None, None])
        y = z if y is None else y + z
    xp = jnp.matmul(x2, norm_col(rp["Gp"]), precision=hp).reshape(N, C, T, V)
    xp = (jnp.einsum("oc,nctv->notv", rp["convp_w"], xp, precision=hp)
          + rp["convp_b"][None, :, None, None])
    xb = jnp.matmul(x2, norm_col(rp["Gb"]), precision=hp).reshape(N, C, T, V)
    xb = (jnp.einsum("oc,nctv->notv", rp["convb_w"], xb, precision=hp)
          + rp["convb_b"][None, :, None, None])
    x_local = jnp.stack([y, xp, xb], axis=1)                  # (N, 3, O, T, V)
    x_sum = x_local.sum(axis=1).mean(-1).mean(-1)             # (N, O)
    temp = jnp.matmul(x_sum, rp["fc_w"].T, precision=hp) + rp["fc_b"]
    att = jnp.stack([jnp.matmul(temp, rp["fcbr_w"][i].T, precision=hp)
                     + rp["fcbr_b"][i] for i in range(3)], axis=1)   # (N, 3, O)
    att = jax.nn.softmax(att, axis=1)
    y2 = (x_local * att[..., None, None]).sum(axis=1)          # (N, O, T, V)
    y2 = ((y2 - rp["bn_rm"][None, :, None, None])
          / jnp.sqrt(rp["bn_rv"] + eps)[None, :, None, None]
          * rp["bn_g"][None, :, None, None] + rp["bn_b"][None, :, None, None])
    res = (jnp.einsum("oc,nctv->notv", rp["down_w"], x, precision=hp)
           + rp["down_b"][None, :, None, None])
    res = ((res - rp["dbn_rm"][None, :, None, None])
           / jnp.sqrt(rp["dbn_rv"] + eps)[None, :, None, None]
           * rp["dbn_g"][None, :, None, None] + rp["dbn_b"][None, :, None, None])
    return jax.nn.relu(y2 + res)


# --------------------------------- main ---------------------------------------
if __name__ == "__main__":
    key = jax.random.PRNGKey(0)
    N, Cin, T, V = 2, 4, 8, 16          # batch, in_channels, frames, joints
    O = 8                               # out_channels (!= Cin -> exercises `down`)
    D = O // 2                          # fc hidden dim

    ks = iter(jax.random.split(key, 32))
    u = lambda shape, lo=0.0, hi=1.0: jax.random.uniform(next(ks), shape, jnp.float32, lo, hi)
    nrm = lambda shape, s=1.0: s * jax.random.normal(next(ks), shape, jnp.float32)

    rp = {
        "A": u((3, V, V)),
        "PA": jnp.full((3, V, V), 1e-6, jnp.float32),
        "Gp": u((V, V)),
        "Gb": u((V, V)),
        "convd_w": nrm((3, O, Cin), 0.3),
        "convd_b": nrm((3, O), 0.1),
        "convp_w": nrm((O, Cin), 0.3),
        "convp_b": nrm((O,), 0.1),
        "convb_w": nrm((O, Cin), 0.3),
        "convb_b": nrm((O,), 0.1),
        "fc_w": nrm((D, O), 0.3),
        "fc_b": nrm((D,), 0.1),
        "fcbr_w": nrm((3, O, D), 0.3),
        "fcbr_b": nrm((3, O), 0.1),
        "bn_g": u((O,), 0.5, 1.5),
        "bn_b": nrm((O,), 0.1),
        "bn_rm": nrm((O,), 0.1),
        "bn_rv": u((O,), 0.5, 1.5),
        "down_w": nrm((O, Cin), 0.3),
        "down_b": nrm((O,), 0.1),
        "dbn_g": u((O,), 0.5, 1.5),
        "dbn_b": nrm((O,), 0.1),
        "dbn_rm": nrm((O,), 0.1),
        "dbn_rv": u((O,), 0.5, 1.5),
    }
    x = jax.random.normal(next(ks), (N, Cin, T, V), jnp.float32)

    params = fold_params(rp)
    out = mlgcn_forward(x, params)
    out = jax.block_until_ready(out)

    ref = ref_forward(x, rp)
    assert out.shape == (N, O, T, V), out.shape
    if not np.allclose(np.asarray(out), np.asarray(ref), atol=5e-4, rtol=5e-4):
        raise AssertionError(
            f"mismatch, max abs err = {float(jnp.max(jnp.abs(out - ref)))}")
    print("KERNEL_OK")
</pallas_src>

<mosaic_0001>
module attributes {stable_mosaic.version = 11 : i64} {
  func.func @_mlgcn_kernel(%arg0: i32, %arg1: i32, %arg2: memref<1x4x128xf32, #tpu.memory_space<vmem>>, %arg3: memref<1x4x1x128xf32, #tpu.memory_space<vmem>>, %arg4: memref<128x640xf32, #tpu.memory_space<vmem>>, %arg5: memref<128x5xf32, #tpu.memory_space<vmem>>, %arg6: memref<48x4xf32, #tpu.memory_space<vmem>>, %arg7: memref<4x9xf32, #tpu.memory_space<vmem>>, %arg8: memref<24x4xf32, #tpu.memory_space<vmem>>, %arg9: memref<8x8xf32, #tpu.memory_space<vmem>>, %arg10: memref<1x8x1x128xf32, #tpu.memory_space<vmem>>, %arg11: memref<48x4xf32, #tpu.memory_space<vmem>>, %arg12: memref<8x1xf32, #tpu.memory_space<vmem>>) attributes {dimension_semantics = [#tpu.dimension_semantics<parallel>, #tpu.dimension_semantics<arbitrary>], iteration_bounds = array<i64: 2, 1>, scalar_prefetch = 0 : i64, scratch_operands = 2 : i64, tpu.core_type = #tpu.core_type<tc>, window_params = [{transform_indices = @transform_0, window_bounds = array<i64: 1, 4, 128>}, {transform_indices = @transform_1, window_bounds = array<i64: 1, 4, 1, 128>}, {pipeline_mode = #tpu.pipeline_mode<synchronous>, transform_indices = @transform_2, window_bounds = array<i64: 128, 640>}, {pipeline_mode = #tpu.pipeline_mode<synchronous>, transform_indices = @transform_3, window_bounds = array<i64: 128, 5>}, {pipeline_mode = #tpu.pipeline_mode<synchronous>, transform_indices = @transform_4, window_bounds = array<i64: 48, 4>}, {pipeline_mode = #tpu.pipeline_mode<synchronous>, transform_indices = @transform_5, window_bounds = array<i64: 4, 9>}, {pipeline_mode = #tpu.pipeline_mode<synchronous>, transform_indices = @transform_6, window_bounds = array<i64: 24, 4>}, {pipeline_mode = #tpu.pipeline_mode<synchronous>, transform_indices = @transform_7, window_bounds = array<i64: 8, 8>}, {transform_indices = @transform_8, window_bounds = array<i64: 1, 8, 1, 128>}]} {
    %c0_i32 = arith.constant 0 : i32
    %0 = arith.cmpi eq, %arg1, %c0_i32 : i32
    %1 = arith.extui %0 : i1 to i32
    %c0_i32_0 = arith.constant 0 : i32
    %2 = arith.cmpi ne, %1, %c0_i32_0 : i32
    scf.if %2 {
      %c0_21 = arith.constant 0 : index
      %c0_22 = arith.constant 0 : index
      %c0_23 = arith.constant 0 : index
      %38 = vector.load %arg2[%c0_21, %c0_22, %c0_23] : memref<1x4x128xf32, #tpu.memory_space<vmem>>, vector<1x4x128xf32>
      %39 = vector.shape_cast %38 : vector<1x4x128xf32> to vector<4x128xf32>
      %c0_24 = arith.constant 0 : index
      %c0_25 = arith.constant 0 : index
      %40 = vector.load %arg6[%c0_24, %c0_25] : memref<48x4xf32, #tpu.memory_space<vmem>>, vector<48x4xf32>
      %c0_26 = arith.constant 0 : index
      %c0_27 = arith.constant 0 : index
      %41 = vector.load %arg5[%c0_26, %c0_27] : memref<128x5xf32, #tpu.memory_space<vmem>>, vector<128x5xf32>
      %cst_28 = arith.constant dense<0.000000e+00> : vector<4x5xf32>
      %42 = tpu.matmul %39, %41, %cst_28 {dimension_numbers = #tpu.dot_dimension_numbers<[1], [0], [0], [1], [0, 0, 1, 1], [], []>} : vector<4x128xf32>, vector<128x5xf32>, vector<4x5xf32> -> vector<4x5xf32>
      %cst_29 = arith.constant 0.000000e+00 : f32
      %43 = vector.broadcast %cst_29 : f32 to vector<8x1xf32>
      %44 = vector.extract_strided_slice %40 {offsets = [0, 0], sizes = [8, 4], strides = [1, 1]} : vector<48x4xf32> to vector<8x4xf32>
      %45 = vector.extract_strided_slice %42 {offsets = [0, 0], sizes = [4, 1], strides = [1, 1]} : vector<4x5xf32> to vector<4x1xf32>
      %cst_30 = arith.constant dense<0.000000e+00> : vector<8x1xf32>
      %46 = tpu.matmul %44, %45, %cst_30 {dimension_numbers = #tpu.dot_dimension_numbers<[1], [0], [0], [1], [0, 0, 1, 1], [], []>} : vector<8x4xf32>, vector<4x1xf32>, vector<8x1xf32> -> vector<8x1xf32>
      %47 = arith.addf %43, %46 : vector<8x1xf32>
      %48 = vector.extract_strided_slice %40 {offsets = [8, 0], sizes = [8, 4], strides = [1, 1]} : vector<48x4xf32> to vector<8x4xf32>
      %49 = vector.extract_strided_slice %42 {offsets = [0, 1], sizes = [4, 1], strides = [1, 1]} : vector<4x5xf32> to vector<4x1xf32>
      %cst_31 = arith.constant dense<0.000000e+00> : vector<8x1xf32>
      %50 = tpu.matmul %48, %49, %cst_31 {dimension_numbers = #tpu.dot_dimension_numbers<[1], [0], [0], [1], [0, 0, 1, 1], [], []>} : vector<8x4xf32>, vector<4x1xf32>, vector<8x1xf32> -> vector<8x1xf32>
      %51 = arith.addf %47, %50 : vector<8x1xf32>
      %52 = vector.extract_strided_slice %40 {offsets = [16, 0], sizes = [8, 4], strides = [1, 1]} : vector<48x4xf32> to vector<8x4xf32>
      %53 = vector.extract_strided_slice %42 {offsets = [0, 2], sizes = [4, 1], strides = [1, 1]} : vector<4x5xf32> to vector<4x1xf32>
      %cst_32 = arith.constant dense<0.000000e+00> : vector<8x1xf32>
      %54 = tpu.matmul %52, %53, %cst_32 {dimension_numbers = #tpu.dot_dimension_numbers<[1], [0], [0], [1], [0, 0, 1, 1], [], []>} : vector<8x4xf32>, vector<4x1xf32>, vector<8x1xf32> -> vector<8x1xf32>
      %55 = arith.addf %51, %54 : vector<8x1xf32>
      %56 = vector.extract_strided_slice %40 {offsets = [24, 0], sizes = [8, 4], strides = [1, 1]} : vector<48x4xf32> to vector<8x4xf32>
      %57 = vector.extract_strided_slice %42 {offsets = [0, 3], sizes = [4, 1], strides = [1, 1]} : vector<4x5xf32> to vector<4x1xf32>
      %cst_33 = arith.constant dense<0.000000e+00> : vector<8x1xf32>
      %58 = tpu.matmul %56, %57, %cst_33 {dimension_numbers = #tpu.dot_dimension_numbers<[1], [0], [0], [1], [0, 0, 1, 1], [], []>} : vector<8x4xf32>, vector<4x1xf32>, vector<8x1xf32> -> vector<8x1xf32>
      %59 = arith.addf %55, %58 : vector<8x1xf32>
      %60 = vector.extract_strided_slice %40 {offsets = [32, 0], sizes = [8, 4], strides = [1, 1]} : vector<48x4xf32> to vector<8x4xf32>
      %61 = vector.extract_strided_slice %42 {offsets = [0, 4], sizes = [4, 1], strides = [1, 1]} : vector<4x5xf32> to vector<4x1xf32>
      %cst_34 = arith.constant dense<0.000000e+00> : vector<8x1xf32>
      %62 = tpu.matmul %60, %61, %cst_34 {dimension_numbers = #tpu.dot_dimension_numbers<[1], [0], [0], [1], [0, 0, 1, 1], [], []>} : vector<8x4xf32>, vector<4x1xf32>, vector<8x1xf32> -> vector<8x1xf32>
      %63 = arith.addf %59, %62 : vector<8x1xf32>
      %c0_35 = arith.constant 0 : index
      %c0_36 = arith.constant 0 : index
      %64 = vector.load %arg7[%c0_35, %c0_36] : memref<4x9xf32, #tpu.memory_space<vmem>>, vector<4x9xf32>
      %65 = vector.extract_strided_slice %64 {offsets = [0, 0], sizes = [4, 8], strides = [1, 1]} : vector<4x9xf32> to vector<4x8xf32>
      %cst_37 = arith.constant dense<0.000000e+00> : vector<4x1xf32>
      %66 = tpu.matmul %65, %63, %cst_37 {dimension_numbers = #tpu.dot_dimension_numbers<[1], [0], [0], [1], [0, 0, 1, 1], [], []>} : vector<4x8xf32>, vector<8x1xf32>, vector<4x1xf32> -> vector<4x1xf32>
      %67 = vector.extract_strided_slice %64 {offsets = [0, 8], sizes = [4, 1], strides = [1, 1]} : vector<4x9xf32> to vector<4x1xf32>
      %68 = arith.addf %66, %67 : vector<4x1xf32>
      %c0_38 = arith.constant 0 : index
      %c0_39 = arith.constant 0 : index
      %69 = vector.load %arg8[%c0_38, %c0_39] : memref<24x4xf32, #tpu.memory_space<vmem>>, vector<24x4xf32>
      %70 = vector.extract_strided_slice %69 {offsets = [0, 0], sizes = [8, 4], strides = [1, 1]} : vector<24x4xf32> to vector<8x4xf32>
      %cst_40 = arith.constant dense<0.000000e+00> : vector<8x1xf32>
      %71 = tpu.matmul %70, %68, %cst_40 {dimension_numbers = #tpu.dot_dimension_numbers<[1], [0], [0], [1], [0, 0, 1, 1], [], []>} : vector<8x4xf32>, vector<4x1xf32>, vector<8x1xf32> -> vector<8x1xf32>
      %72 = vector.extract_strided_slice %69 {offsets = [8, 0], sizes = [8, 4], strides = [1, 1]} : vector<24x4xf32> to vector<8x4xf32>
      %cst_41 = arith.constant dense<0.000000e+00> : vector<8x1xf32>
      %73 = tpu.matmul %72, %68, %cst_41 {dimension_numbers = #tpu.dot_dimension_numbers<[1], [0], [0], [1], [0, 0, 1, 1], [], []>} : vector<8x4xf32>, vector<4x1xf32>, vector<8x1xf32> -> vector<8x1xf32>
      %74 = vector.extract_strided_slice %69 {offsets = [16, 0], sizes = [8, 4], strides = [1, 1]} : vector<24x4xf32> to vector<8x4xf32>
      %cst_42 = arith.constant dense<0.000000e+00> : vector<8x1xf32>
      %75 = tpu.matmul %74, %68, %cst_42 {dimension_numbers = #tpu.dot_dimension_numbers<[1], [0], [0], [1], [0, 0, 1, 1], [], []>} : vector<8x4xf32>, vector<4x1xf32>, vector<8x1xf32> -> vector<8x1xf32>
      %76 = tpu.concatenate %71, %73, %75 in 1 : vector<8x1xf32>, vector<8x1xf32>, vector<8x1xf32> -> vector<8x3xf32>
      %c0_43 = arith.constant 0 : index
      %c5 = arith.constant 5 : index
      %77 = vector.load %arg9[%c0_43, %c5] : memref<8x8xf32, #tpu.memory_space<vmem>>, vector<8x3xf32>
      %78 = arith.addf %76, %77 : vector<8x3xf32>
      %cst_44 = arith.constant dense<0xFF800000> : vector<8xf32>
      %79 = vector.multi_reduction <maximumf>, %78, %cst_44 [1] : vector<8x3xf32> to vector<8xf32>
      %80 = vector.shape_cast %79 : vector<8xf32> to vector<8x1xf32>
      %81 = vector.broadcast %80 : vector<8x1xf32> to vector<8x3xf32>
      %82 = arith.subf %78, %81 : vector<8x3xf32>
      %83 = math.exp %82 : vector<8x3xf32>
      %cst_45 = arith.constant dense<0.000000e+00> : vector<8xf32>
      %84 = vector.multi_reduction <add>, %83, %cst_45 [1] : vector<8x3xf32> to vector<8xf32>
      %85 = vector.shape_cast %84 : vector<8xf32> to vector<8x1xf32>
      %86 = vector.broadcast %85 : vector<8x1xf32> to vector<8x3xf32>
      %87 = arith.divf %83, %86 : vector<8x3xf32>
      %c0_46 = arith.constant 0 : index
      %c3 = arith.constant 3 : index
      %88 = vector.load %arg9[%c0_46, %c3] : memref<8x8xf32, #tpu.memory_space<vmem>>, vector<8x1xf32>
      %89 = vector.broadcast %88 : vector<8x1xf32> to vector<8x3xf32>
      %90 = arith.mulf %87, %89 : vector<8x3xf32>
      %c0_47 = arith.constant 0 : index
      %c0_48 = arith.constant 0 : index
      %91 = vector.load %arg9[%c0_47, %c0_48] : memref<8x8xf32, #tpu.memory_space<vmem>>, vector<8x3xf32>
      %92 = arith.mulf %90, %91 : vector<8x3xf32>
      %cst_49 = arith.constant dense<0.000000e+00> : vector<8xf32>
      %93 = vector.multi_reduction <add>, %92, %cst_49 [1] : vector<8x3xf32> to vector<8xf32>
      %94 = vector.shape_cast %93 : vector<8xf32> to vector<8x1xf32>
      %c0_50 = arith.constant 0 : index
      %c4 = arith.constant 4 : index
      %95 = vector.load %arg9[%c0_50, %c4] : memref<8x8xf32, #tpu.memory_space<vmem>>, vector<8x1xf32>
      %96 = arith.addf %94, %95 : vector<8x1xf32>
      %c0_51 = arith.constant 0 : index
      %c0_52 = arith.constant 0 : index
      %97 = vector.load %arg12[%c0_51, %c0_52] : memref<8x1xf32, #tpu.memory_space<vmem>>, vector<8x1xf32>
      tpu.vector_store %arg12[%c0_51, %c0_52], %96 {strides = array<i32>} : memref<8x1xf32, #tpu.memory_space<vmem>>, vector<8x1xf32>,
      %98 = vector.extract_strided_slice %90 {offsets = [0, 0], sizes = [8, 1], strides = [1, 1]} : vector<8x3xf32> to vector<8x1xf32>
      %99 = vector.extract_strided_slice %90 {offsets = [0, 0], sizes = [8, 1], strides = [1, 1]} : vector<8x3xf32> to vector<8x1xf32>
      %100 = vector.extract_strided_slice %90 {offsets = [0, 0], sizes = [8, 1], strides = [1, 1]} : vector<8x3xf32> to vector<8x1xf32>
      %101 = vector.extract_strided_slice %90 {offsets = [0, 1], sizes = [8, 1], strides = [1, 1]} : vector<8x3xf32> to vector<8x1xf32>
      %102 = vector.extract_strided_slice %90 {offsets = [0, 2], sizes = [8, 1], strides = [1, 1]} : vector<8x3xf32> to vector<8x1xf32>
      %cst_53 = arith.constant 1.000000e+00 : f32
      %103 = vector.broadcast %cst_53 : f32 to vector<8x1xf32>
      %104 = tpu.concatenate %98, %99, %100, %101, %102, %103 in 0 : vector<8x1xf32>, vector<8x1xf32>, vector<8x1xf32>, vector<8x1xf32>, vector<8x1xf32>, vector<8x1xf32> -> vector<48x1xf32>
      %105 = vector.broadcast %104 : vector<48x1xf32> to vector<48x4xf32>
      %106 = arith.mulf %40, %105 : vector<48x4xf32>
      %c0_54 = arith.constant 0 : index
      %c0_55 = arith.constant 0 : index
      %107 = vector.load %arg11[%c0_54, %c0_55] : memref<48x4xf32, #tpu.memory_space<vmem>>, vector<48x4xf32>
      tpu.vector_store %arg11[%c0_54, %c0_55], %106 {strides = array<i32>} : memref<48x4xf32, #tpu.memory_space<vmem>>, vector<48x4xf32>,
    } else {
    }
    %c0 = arith.constant 0 : index
    %c0_1 = arith.constant 0 : index
    %c0_2 = arith.constant 0 : index
    %c0_3 = arith.constant 0 : index
    %3 = vector.load %arg3[%c0, %c0_1, %c0_2, %c0_3] : memref<1x4x1x128xf32, #tpu.memory_space<vmem>>, vector<1x4x1x128xf32>
    %4 = vector.shape_cast %3 : vector<1x4x1x128xf32> to vector<4x128xf32>
    %c0_4 = arith.constant 0 : index
    %c0_5 = arith.constant 0 : index
    %5 = vector.load %arg4[%c0_4, %c0_5] : memref<128x640xf32, #tpu.memory_space<vmem>>, vector<128x640xf32>
    %cst = arith.constant dense<0.000000e+00> : vector<4x640xf32>
    %6 = tpu.matmul %4, %5, %cst {dimension_numbers = #tpu.dot_dimension_numbers<[1], [0], [0], [1], [0, 0, 1, 1], [], []>} : vector<4x128xf32>, vector<128x640xf32>, vector<4x640xf32> -> vector<4x640xf32>
    %c0_6 = arith.constant 0 : index
    %c0_7 = arith.constant 0 : index
    %7 = vector.load %arg11[%c0_6, %c0_7] : memref<48x4xf32, #tpu.memory_space<vmem>>, vector<48x4xf32>
    %8 = vector.extract_strided_slice %7 {offsets = [40, 0], sizes = [8, 4], strides = [1, 1]} : vector<48x4xf32> to vector<8x4xf32>
    %cst_8 = arith.constant dense<0.000000e+00> : vector<8x128xf32>
    %9 = tpu.matmul %8, %4, %cst_8 {dimension_numbers = #tpu.dot_dimension_numbers<[1], [0], [0], [1], [0, 0, 1, 1], [], []>} : vector<8x4xf32>, vector<4x128xf32>, vector<8x128xf32> -> vector<8x128xf32>
    %10 = vector.extract_strided_slice %7 {offsets = [0, 0], sizes = [8, 4], strides = [1, 1]} : vector<48x4xf32> to vector<8x4xf32>
    %11 = vector.extract_strided_slice %6 {offsets = [0, 0], sizes = [4, 128], strides = [1, 1]} : vector<4x640xf32> to vector<4x128xf32>
    %cst_9 = arith.constant dense<0.000000e+00> : vector<8x128xf32>
    %12 = tpu.matmul %10, %11, %cst_9 {dimension_numbers = #tpu.dot_dimension_numbers<[1], [0], [0], [1], [0, 0, 1, 1], [], []>} : vector<8x4xf32>, vector<4x128xf32>, vector<8x128xf32> -> vector<8x128xf32>
    %13 = arith.addf %9, %12 : vector<8x128xf32>
    %14 = vector.extract_strided_slice %7 {offsets = [8, 0], sizes = [8, 4], strides = [1, 1]} : vector<48x4xf32> to vector<8x4xf32>
    %15 = vector.extract_strided_slice %6 {offsets = [0, 128], sizes = [4, 128], strides = [1, 1]} : vector<4x640xf32> to vector<4x128xf32>
    %cst_10 = arith.constant dense<0.000000e+00> : vector<8x128xf32>
    %16 = tpu.matmul %14, %15, %cst_10 {dimension_numbers = #tpu.dot_dimension_numbers<[1], [0], [0], [1], [0, 0, 1, 1], [], []>} : vector<8x4xf32>, vector<4x128xf32>, vector<8x128xf32> -> vector<8x128xf32>
    %17 = arith.addf %13, %16 : vector<8x128xf32>
    %18 = vector.extract_strided_slice %7 {offsets = [16, 0], sizes = [8, 4], strides = [1, 1]} : vector<48x4xf32> to vector<8x4xf32>
    %19 = vector.extract_strided_slice %6 {offsets = [0, 256], sizes = [4, 128], strides = [1, 1]} : vector<4x640xf32> to vector<4x128xf32>
    %cst_11 = arith.constant dense<0.000000e+00> : vector<8x128xf32>
    %20 = tpu.matmul %18, %19, %cst_11 {dimension_numbers = #tpu.dot_dimension_numbers<[1], [0], [0], [1], [0, 0, 1, 1], [], []>} : vector<8x4xf32>, vector<4x128xf32>, vector<8x128xf32> -> vector<8x128xf32>
    %21 = arith.addf %17, %20 : vector<8x128xf32>
    %22 = vector.extract_strided_slice %7 {offsets = [24, 0], sizes = [8, 4], strides = [1, 1]} : vector<48x4xf32> to vector<8x4xf32>
    %23 = vector.extract_strided_slice %6 {offsets = [0, 384], sizes = [4, 128], strides = [1, 1]} : vector<4x640xf32> to vector<4x128xf32>
    %cst_12 = arith.constant dense<0.000000e+00> : vector<8x128xf32>
    %24 = tpu.matmul %22, %23, %cst_12 {dimension_numbers = #tpu.dot_dimension_numbers<[1], [0], [0], [1], [0, 0, 1, 1], [], []>} : vector<8x4xf32>, vector<4x128xf32>, vector<8x128xf32> -> vector<8x128xf32>
    %25 = arith.addf %21, %24 : vector<8x128xf32>
    %26 = vector.extract_strided_slice %7 {offsets = [32, 0], sizes = [8, 4], strides = [1, 1]} : vector<48x4xf32> to vector<8x4xf32>
    %27 = vector.extract_strided_slice %6 {offsets = [0, 512], sizes = [4, 128], strides = [1, 1]} : vector<4x640xf32> to vector<4x128xf32>
    %cst_13 = arith.constant dense<0.000000e+00> : vector<8x128xf32>
    %28 = tpu.matmul %26, %27, %cst_13 {dimension_numbers = #tpu.dot_dimension_numbers<[1], [0], [0], [1], [0, 0, 1, 1], [], []>} : vector<8x4xf32>, vector<4x128xf32>, vector<8x128xf32> -> vector<8x128xf32>
    %29 = arith.addf %25, %28 : vector<8x128xf32>
    %c0_14 = arith.constant 0 : index
    %c0_15 = arith.constant 0 : index
    %30 = vector.load %arg12[%c0_14, %c0_15] : memref<8x1xf32, #tpu.memory_space<vmem>>, vector<8x1xf32>
    %31 = vector.broadcast %30 : vector<8x1xf32> to vector<8x128xf32>
    %32 = arith.addf %29, %31 : vector<8x128xf32>
    %cst_16 = arith.constant 0.000000e+00 : f32
    %33 = vector.broadcast %cst_16 : f32 to vector<8x128xf32>
    %34 = arith.maximumf %32, %33 : vector<8x128xf32>
    %c0_17 = arith.constant 0 : index
    %c0_18 = arith.constant 0 : index
    %c0_19 = arith.constant 0 : index
    %c0_20 = arith.constant 0 : index
    %35 = vector.load %arg10[%c0_17, %c0_18, %c0_19, %c0_20] : memref<1x8x1x128xf32, #tpu.memory_space<vmem>>, vector<1x8x1x128xf32>
    %36 = vector.shape_cast %35 : vector<1x8x1x128xf32> to vector<8x128xf32>
    %37 = vector.shape_cast %34 : vector<8x128xf32> to vector<1x8x1x128xf32>
    tpu.vector_store %arg10[%c0_17, %c0_18, %c0_19, %c0_20], %37 {strides = array<i32>} : memref<1x8x1x128xf32, #tpu.memory_space<vmem>>, vector<1x8x1x128xf32>,
    return
  }
  func.func @transform_0(%arg0: i32, %arg1: i32) -> (i32, i32, i32) {
    %c0_i32 = arith.constant 0 : i32
    %c0_i32_0 = arith.constant 0 : i32
    %c0_i32_1 = arith.constant 0 : i32
    return %arg0, %c0_i32, %c0_i32_0 : i32, i32, i32
  }
  func.func @transform_1(%arg0: i32, %arg1: i32) -> (i32, i32, i32, i32) {
    %c0_i32 = arith.constant 0 : i32
    %c0_i32_0 = arith.constant 0 : i32
    %c0_i32_1 = arith.constant 0 : i32
    return %arg0, %c0_i32, %arg1, %c0_i32_0 : i32, i32, i32, i32
  }
  func.func @transform_2(%arg0: i32, %arg1: i32) -> (i32, i32) {
    %c0_i32 = arith.constant 0 : i32
    %c0_i32_0 = arith.constant 0 : i32
    %c0_i32_1 = arith.constant 0 : i32
    return %c0_i32, %c0_i32_0 : i32, i32
  }
  func.func @transform_3(%arg0: i32, %arg1: i32) -> (i32, i32) {
    %c0_i32 = arith.constant 0 : i32
    %c0_i32_0 = arith.constant 0 : i32
    %c0_i32_1 = arith.constant 0 : i32
    return %c0_i32, %c0_i32_0 : i32, i32
  }
  func.func @transform_4(%arg0: i32, %arg1: i32) -> (i32, i32) {
    %c0_i32 = arith.constant 0 : i32
    %c0_i32_0 = arith.constant 0 : i32
    %c0_i32_1 = arith.constant 0 : i32
    return %c0_i32, %c0_i32_0 : i32, i32
  }
  func.func @transform_5(%arg0: i32, %arg1: i32) -> (i32, i32) {
    %c0_i32 = arith.constant 0 : i32
    %c0_i32_0 = arith.constant 0 : i32
    %c0_i32_1 = arith.constant 0 : i32
    return %c0_i32, %c0_i32_0 : i32, i32
  }
  func.func @transform_6(%arg0: i32, %arg1: i32) -> (i32, i32) {
    %c0_i32 = arith.constant 0 : i32
    %c0_i32_0 = arith.constant 0 : i32
    %c0_i32_1 = arith.constant 0 : i32
    return %c0_i32, %c0_i32_0 : i32, i32
  }
  func.func @transform_7(%arg0: i32, %arg1: i32) -> (i32, i32) {
    %c0_i32 = arith.constant 0 : i32
    %c0_i32_0 = arith.constant 0 : i32
    %c0_i32_1 = arith.constant 0 : i32
    return %c0_i32, %c0_i32_0 : i32, i32
  }
  func.func @transform_8(%arg0: i32, %arg1: i32) -> (i32, i32, i32, i32) {
    %c0_i32 = arith.constant 0 : i32
    %c0_i32_0 = arith.constant 0 : i32
    %c0_i32_1 = arith.constant 0 : i32
    return %arg0, %c0_i32, %arg1, %c0_i32_0 : i32, i32, i32, i32
  }
}

</mosaic_0001>

<llo_original>
// kernel: tpu_custom_call.1
$region0: #{tpu_custom_call.1}
  #allocation0 [shape = 'u32[]', space=smem, size = 0x4, offset = 0x4, fixed_abs, tag = 'smem constant byte address 0x4 - core index']
  #allocation1 [shape = 'u32[144,128]{1,0:T(1,128)}', space=vmem, size = 0x12000, scoped, tag = 'internal scratch']
  #allocation2 [shape = 'f32[48,4]{1,0:T(8,128)}', space=vmem, size = 0x6000, scoped, tag = 'scratch operand']
  #allocation3 [shape = 'f32[8,1]{1,0:T(8,128)}', space=vmem, size = 0x1000, scoped, tag = 'scratch operand']
  %s0 = inlined_call_operand.vmem [shape: f32[2,4,128], index: 0, kind: input, shape index: {}]
  %s1 = inlined_call_operand.vmem [shape: f32[2,4,1,128], index: 1, kind: input, shape index: {}]
  %s2 = inlined_call_operand.hbm [shape: f32[128,640], index: 2, kind: input, shape index: {}]
  %s3 = inlined_call_operand.vmem [shape: f32[128,5], index: 3, kind: input, shape index: {}]
  %s4 = inlined_call_operand.vmem [shape: f32[48,4], index: 4, kind: input, shape index: {}]
  %s5 = inlined_call_operand.vmem [shape: f32[4,9], index: 5, kind: input, shape index: {}]
  %s6 = inlined_call_operand.vmem [shape: f32[24,4], index: 6, kind: input, shape index: {}]
  %s7 = inlined_call_operand.vmem [shape: f32[8,8], index: 7, kind: input, shape index: {}]
  %s8 = inlined_call_operand.hbm [shape: f32[2,8,1,128], index: 8, kind: output, shape index: {}]
  %s9 = sld [smem:[#allocation0]]
  $region73: #{tpu_custom_call.1} parent=0
    _
  %s11 = ssub.s32 1, %s9
  %s12 = scalar_select 0, %s11, %s9
  $region1: #{tpu_custom_call.1} parent=0
    #allocation4 [shape = 'u8[327680]{0}', space=vmem, size = 0x50000, scoped, tag = 'input window, operand 2, single buffered']
    #allocation5 [shape = 's32[2]{0}', space=sflag, size = 0x8, scoped, tag = 'scoped memory for tpu_custom_call.1']
    #allocation6 [shape = 's32[2]{0}', space=sflag, size = 0x8, scoped, tag = 'scoped memory for tpu_custom_call.1']
    #allocation7 [shape = 'u8[8192]{0}', space=vmem, size = 0x2000, scoped, tag = 'output window, operand 0']
    %13 = vsyncpa [#allocation5], 0
    %14 = vsyncpa [#allocation6], 0
    %s15 = scalar_lea.sflag [#allocation6], 1
    %16 = vsyncpa %s15, 0
    loop: start=0, step=1, limit=4
    $region2: #{tpu_custom_call.1} parent=1 // loop_pre_header
      _
    $region3: #{tpu_custom_call.1} parent=1 // loop_header
      %s18 = sphi 0, %s22
      %p19 = scmp.ge.s32.totalorder %s18, 4
      %s25 = sphi 0, %s37
      %s26 = sphi 0, %s33
      %s27 = sphi 0, %s25
      %s28 = sphi 0, %s26
      %s29 = sphi 0, %s27
      %s30 = sphi 0, %s28
      %s40 = sphi 0, %s42
      %s43 = sphi 0, %s40
      %s44 = sphi 0, %s43
      %s60 = sphi 0, %s44
      %s68 = sphi 0, %s70
      %s71 = sphi 0, %s68
      %s72 = sphi 0, %s71
      %s88 = sphi 0, %s72
      %s92 = sphi 0, %s92
      %s94 = sphi 0, %s92
      %s95 = sphi 0, %s94
      %s109 = sphi 0, %s95
      %s113 = sphi 0, %s113
      %s115 = sphi 0, %s113
      %s116 = sphi 0, %s115
      %s130 = sphi 0, %s116
      %s134 = sphi 0, %s134
      %s136 = sphi 0, %s134
      %s137 = sphi 0, %s136
      %s151 = sphi 0, %s137
      %s155 = sphi 0, %s155
      %s157 = sphi 0, %s155
      %s158 = sphi 0, %s157
      %s172 = sphi 0, %s158
      %s176 = sphi 0, %s176
      %s178 = sphi 0, %s176
      %s179 = sphi 0, %s178
      %s193 = sphi 0, %s179
      %s197 = sphi 0, %s197
      %s199 = sphi 0, %s197
      %s200 = sphi 0, %s199
      %s214 = sphi 0, %s200
      %s222 = sphi 0, %s224
      %s225 = sphi 0, %s222
      %s226 = sphi 0, %s225
      %s242 = sphi 0, %s226
    $region4: #{tpu_custom_call.1} parent=1 // loop_header_branch
      %21 = sbr.rel (%p19) target = $region8
    $region5: #{tpu_custom_call.1} parent=1 // loop_body
      %s23 = ssub.s32 %s18, 1
      %s24 = ssub.s32 %s18, 2
      %s31 = sadd.s32 1, %s26
      %p32 = scmp.ge.s32.totalorder %s31, 1
      %s33 = scalar_select %p32, 0, %s31
      %s34 = sadd.s32 1, %s25
      %s35 = scalar_select %p32, %s34, %s25
      %p36 = scmp.ge.s32.totalorder %s35, 2
      %s37 = scalar_select %p36, 0, %s35
      %s38 = ssub.s32 %s25, %s37
      %p39 = scmp.eq.s32.totalorder %s38, 0
      %s41 = sadd.s32 %s40, 1
      %s42 = scalar_select %p39, %s40, %s41
      %p45 = pneg %p39
      %p46 = scmp.eq.s32.totalorder %s18, 1
      %p47 = por %p45, %p46
      %p48 = scmp.ne.s32.totalorder %s40, %s43
      %p49 = scmp.eq.s32.totalorder %s18, 0
      %p50 = por %p48, %p49
      %p51 = scmp.ne.s32.totalorder %s40, %s43
      %p52 = scmp.eq.s32.totalorder %s23, 1
      %p53 = por %p51, %p52
      %p54 = scmp.ne.s32.totalorder %s43, %s44
      %p55 = scmp.eq.s32.totalorder %s23, 0
      %p56 = por %p54, %p55
      %p57 = scmp.ne.s32.totalorder %s43, %s44
      %p58 = scmp.eq.s32.totalorder %s24, 1
      %p59 = por %p57, %p58
      %p61 = scmp.ne.s32.totalorder %s44, %s60
      %p62 = scmp.eq.s32.totalorder %s24, 0
      %p63 = por %p61, %p62
      %s64 = ssub.s32 %s25, %s37
      %s65 = ssub.s32 %s26, %s33
      %s66 = sor.u32 %s64, %s65
      %p67 = scmp.eq.s32.totalorder %s66, 0
      %s69 = sadd.s32 %s68, 1
      %s70 = scalar_select %p67, %s68, %s69
      %p73 = pneg %p67
      %p74 = scmp.eq.s32.totalorder %s18, 1
      %p75 = por %p73, %p74
      %p76 = scmp.ne.s32.totalorder %s68, %s71
      %p77 = scmp.eq.s32.totalorder %s18, 0
      %p78 = por %p76, %p77
      %p79 = scmp.ne.s32.totalorder %s68, %s71
      %p80 = scmp.eq.s32.totalorder %s23, 1
      %p81 = por %p79, %p80
      %p82 = scmp.ne.s32.totalorder %s71, %s72
      %p83 = scmp.eq.s32.totalorder %s23, 0
      %p84 = por %p82, %p83
      %p85 = scmp.ne.s32.totalorder %s71, %s72
      %p86 = scmp.eq.s32.totalorder %s24, 1
      %p87 = por %p85, %p86
      %p89 = scmp.ne.s32.totalorder %s72, %s88
      %p90 = scmp.eq.s32.totalorder %s24, 0
      %p91 = por %p89, %p90
      %s93 = sadd.s32 %s92, 1
      %p96 = scmp.eq.s32.totalorder %s18, 1
      %p97 = scmp.ne.s32.totalorder %s92, %s94
      %p98 = scmp.eq.s32.totalorder %s18, 0
      %p99 = por %p97, %p98
      %p100 = scmp.ne.s32.totalorder %s92, %s94
      %p101 = scmp.eq.s32.totalorder %s23, 1
      %p102 = por %p100, %p101
      %p103 = scmp.ne.s32.totalorder %s94, %s95
      %p104 = scmp.eq.s32.totalorder %s23, 0
      %p105 = por %p103, %p104
      %p106 = scmp.ne.s32.totalorder %s94, %s95
      %p107 = scmp.eq.s32.totalorder %s24, 1
      %p108 = por %p106, %p107
      %p110 = scmp.ne.s32.totalorder %s95, %s109
      %p111 = scmp.eq.s32.totalorder %s24, 0
      %p112 = por %p110, %p111
      %s114 = sadd.s32 %s113, 1
      %p117 = scmp.eq.s32.totalorder %s18, 1
      %p118 = scmp.ne.s32.totalorder %s113, %s115
      %p119 = scmp.eq.s32.totalorder %s18, 0
      %p120 = por %p118, %p119
      %p121 = scmp.ne.s32.totalorder %s113, %s115
      %p122 = scmp.eq.s32.totalorder %s23, 1
      %p123 = por %p121, %p122
      %p124 = scmp.ne.s32.totalorder %s115, %s116
      %p125 = scmp.eq.s32.totalorder %s23, 0
      %p126 = por %p124, %p125
      %p127 = scmp.ne.s32.totalorder %s115, %s116
      %p128 = scmp.eq.s32.totalorder %s24, 1
      %p129 = por %p127, %p128
      %p131 = scmp.ne.s32.totalorder %s116, %s130
      %p132 = scmp.eq.s32.totalorder %s24, 0
      %p133 = por %p131, %p132
      %s135 = sadd.s32 %s134, 1
      %p138 = scmp.eq.s32.totalorder %s18, 1
      %p139 = scmp.ne.s32.totalorder %s134, %s136
      %p140 = scmp.eq.s32.totalorder %s18, 0
      %p141 = por %p139, %p140
      %p142 = scmp.ne.s32.totalorder %s134, %s136
      %p143 = scmp.eq.s32.totalorder %s23, 1
      %p144 = por %p142, %p143
      %p145 = scmp.ne.s32.totalorder %s136, %s137
      %p146 = scmp.eq.s32.totalorder %s23, 0
      %p147 = por %p145, %p146
      %p148 = scmp.ne.s32.totalorder %s136, %s137
      %p149 = scmp.eq.s32.totalorder %s24, 1
      %p150 = por %p148, %p149
      %p152 = scmp.ne.s32.totalorder %s137, %s151
      %p153 = scmp.eq.s32.totalorder %s24, 0
      %p154 = por %p152, %p153
      %s156 = sadd.s32 %s155, 1
      %p159 = scmp.eq.s32.totalorder %s18, 1
      %p160 = scmp.ne.s32.totalorder %s155, %s157
      %p161 = scmp.eq.s32.totalorder %s18, 0
      %p162 = por %p160, %p161
      %p163 = scmp.ne.s32.totalorder %s155, %s157
      %p164 = scmp.eq.s32.totalorder %s23, 1
      %p165 = por %p163, %p164
      %p166 = scmp.ne.s32.totalorder %s157, %s158
      %p167 = scmp.eq.s32.totalorder %s23, 0
      %p168 = por %p166, %p167
      %p169 = scmp.ne.s32.totalorder %s157, %s158
      %p170 = scmp.eq.s32.totalorder %s24, 1
      %p171 = por %p169, %p170
      %p173 = scmp.ne.s32.totalorder %s158, %s172
      %p174 = scmp.eq.s32.totalorder %s24, 0
      %p175 = por %p173, %p174
      %s177 = sadd.s32 %s176, 1
      %p180 = scmp.eq.s32.totalorder %s18, 1
      %p181 = scmp.ne.s32.totalorder %s176, %s178
      %p182 = scmp.eq.s32.totalorder %s18, 0
      %p183 = por %p181, %p182
      %p184 = scmp.ne.s32.totalorder %s176, %s178
      %p185 = scmp.eq.s32.totalorder %s23, 1
      %p186 = por %p184, %p185
      %p187 = scmp.ne.s32.totalorder %s178, %s179
      %p188 = scmp.eq.s32.totalorder %s23, 0
      %p189 = por %p187, %p188
      %p190 = scmp.ne.s32.totalorder %s178, %s179
      %p191 = scmp.eq.s32.totalorder %s24, 1
      %p192 = por %p190, %p191
      %p194 = scmp.ne.s32.totalorder %s179, %s193
      %p195 = scmp.eq.s32.totalorder %s24, 0
      %p196 = por %p194, %p195
      %s198 = sadd.s32 %s197, 1
      %p201 = scmp.eq.s32.totalorder %s18, 1
      %p202 = scmp.ne.s32.totalorder %s197, %s199
      %p203 = scmp.eq.s32.totalorder %s18, 0
      %p204 = por %p202, %p203
      %p205 = scmp.ne.s32.totalorder %s197, %s199
      %p206 = scmp.eq.s32.totalorder %s23, 1
      %p207 = por %p205, %p206
      %p208 = scmp.ne.s32.totalorder %s199, %s200
      %p209 = scmp.eq.s32.totalorder %s23, 0
      %p210 = por %p208, %p209
      %p211 = scmp.ne.s32.totalorder %s199, %s200
      %p212 = scmp.eq.s32.totalorder %s24, 1
      %p213 = por %p211, %p212
      %p215 = scmp.ne.s32.totalorder %s200, %s214
      %p216 = scmp.eq.s32.totalorder %s24, 0
      %p217 = por %p215, %p216
      %s218 = ssub.s32 %s25, %s37
      %s219 = ssub.s32 %s26, %s33
      %s220 = sor.u32 %s218, %s219
      %p221 = scmp.eq.s32.totalorder %s220, 0
      %s223 = sadd.s32 %s222, 1
      %s224 = scalar_select %p221, %s222, %s223
      %p227 = pneg %p221
      %p228 = scmp.eq.s32.totalorder %s18, 1
      %p229 = por %p227, %p228
      %p230 = scmp.ne.s32.totalorder %s222, %s225
      %p231 = scmp.eq.s32.totalorder %s18, 0
      %p232 = por %p230, %p231
      %p233 = scmp.ne.s32.totalorder %s222, %s225
      %p234 = scmp.eq.s32.totalorder %s23, 1
      %p235 = por %p233, %p234
      %p236 = scmp.ne.s32.totalorder %s225, %s226
      %p237 = scmp.eq.s32.totalorder %s23, 0
      %p238 = por %p236, %p237
      %p239 = scmp.ne.s32.totalorder %s225, %s226
      %p240 = scmp.eq.s32.totalorder %s24, 1
      %p241 = por %p239, %p240
      %p243 = scmp.ne.s32.totalorder %s226, %s242
      %p244 = scmp.eq.s32.totalorder %s24, 0
      %p245 = por %p243, %p244
      %p246 = scmp.le.s32.totalorder 1, %s18
      %p247 = scmp.lt.s32.totalorder %s18, 3
      %p248 = pnand %p246, %p247
      %p249 = pneg %p248
      // Predicated region
      $region9: #{tpu_custom_call.1} parent=5 // pred_check
        _
      $region10: #{tpu_custom_call.1} parent=5 // pred_check_branch
        %251 = sbr.rel (%p248) target = $region12
      $region11: #{tpu_custom_call.1} parent=5 // pred_region
        %s252 = ssub.s32 %s18, 1
        // Predicated region
        $region13: #{tpu_custom_call.1} parent=11 // pred_check
          %p253 = pneg %p105
        $region14: #{tpu_custom_call.1} parent=11 // pred_check_branch
          %255 = sbr.rel (%p253) target = $region16
        $region15: #{tpu_custom_call.1} parent=11 // pred_region
          %s257 = ssub.s32 10240, 10240
          %258 = vsyncadd [#allocation5], %s257
          %s259 = sshll.u32 [#allocation4], 4
          %s260 = int_to_ptr.vmem [resolvable:$true] %s259
          %265 = dma.hbm_to_vmem [thread:$0]  %s2, 10240, %s260, [#allocation5], 640, 640, 40
        $region16: #{tpu_custom_call.1} parent=11 // pred_fallthru
          _
        // Predicated region
        $region17: #{tpu_custom_call.1} parent=11 // pred_check
          %p266 = pneg %p126
        $region18: #{tpu_custom_call.1} parent=11 // pred_check_branch
          %268 = sbr.rel (%p266) target = $region20
        $region19: #{tpu_custom_call.1} parent=11 // pred_region
          _
        $region20: #{tpu_custom_call.1} parent=11 // pred_fallthru
          _
        // Predicated region
        $region21: #{tpu_custom_call.1} parent=11 // pred_check
          %p269 = pneg %p147
        $region22: #{tpu_custom_call.1} parent=11 // pred_check_branch
          %271 = sbr.rel (%p269) target = $region24
        $region23: #{tpu_custom_call.1} parent=11 // pred_region
          _
        $region24: #{tpu_custom_call.1} parent=11 // pred_fallthru
          _
        // Predicated region
        $region25: #{tpu_custom_call.1} parent=11 // pred_check
          %p272 = pneg %p168
        $region26: #{tpu_custom_call.1} parent=11 // pred_check_branch
          %274 = sbr.rel (%p272) target = $region28
        $region27: #{tpu_custom_call.1} parent=11 // pred_region
          _
        $region28: #{tpu_custom_call.1} parent=11 // pred_fallthru
          _
        // Predicated region
        $region29: #{tpu_custom_call.1} parent=11 // pred_check
          %p275 = pneg %p189
        $region30: #{tpu_custom_call.1} parent=11 // pred_check_branch
          %277 = sbr.rel (%p275) target = $region32
        $region31: #{tpu_custom_call.1} parent=11 // pred_region
          _
        $region32: #{tpu_custom_call.1} parent=11 // pred_fallthru
          _
        // Predicated region
        $region33: #{tpu_custom_call.1} parent=11 // pred_check
          %p278 = pneg %p210
        $region34: #{tpu_custom_call.1} parent=11 // pred_check_branch
          %280 = sbr.rel (%p278) target = $region36
        $region35: #{tpu_custom_call.1} parent=11 // pred_region
          _
        $region36: #{tpu_custom_call.1} parent=11 // pred_fallthru
          _
      $region12: #{tpu_custom_call.1} parent=5 // pred_fallthru
        _
      %p281 = scmp.lt.s32.totalorder %s18, 2
      // Predicated region
      $region37: #{tpu_custom_call.1} parent=5 // pred_check
        %p282 = pneg %p281
      $region38: #{tpu_custom_call.1} parent=5 // pred_check_branch
        %284 = sbr.rel (%p282) target = $region40
      $region39: #{tpu_custom_call.1} parent=5 // pred_region
        // Predicated region
        $region41: #{tpu_custom_call.1} parent=39 // pred_check
          %p285 = pneg %p50
        $region42: #{tpu_custom_call.1} parent=39 // pred_check_branch
          %287 = sbr.rel (%p285) target = $region44
        $region43: #{tpu_custom_call.1} parent=39 // pred_region
          %p288 = scmp.lt.s32.totalorder %s25, 1
          %s289 = scalar_select %p288, %s25, 1
          %s290 = smul.addr %s289, 4
          %s291 = scalar_lea.vmem %s0, %s290
        $region44: #{tpu_custom_call.1} parent=39 // pred_fallthru
          _
        // Predicated region
        $region45: #{tpu_custom_call.1} parent=39 // pred_check
          %p292 = pneg %p78
        $region46: #{tpu_custom_call.1} parent=39 // pred_check_branch
          %294 = sbr.rel (%p292) target = $region48
        $region47: #{tpu_custom_call.1} parent=39 // pred_region
          %p295 = scmp.lt.s32.totalorder %s25, 1
          %s296 = scalar_select %p295, %s25, 1
          %p297 = scmp.lt.s32.totalorder %s26, 0
          %s298 = scalar_select %p297, %s26, 0
          %s299 = smul.addr %s296, 4
          %s300 = sadd.s32 %s298, %s299
          %s301 = scalar_lea.vmem %s1, %s300
        $region48: #{tpu_custom_call.1} parent=39 // pred_fallthru
          _
      $region40: #{tpu_custom_call.1} parent=5 // pred_fallthru
        _
      %p302 = scmp.le.s32.totalorder 1, %s18
      %p303 = scmp.lt.s32.totalorder %s18, 3
      %p304 = pnand %p302, %p303
      %p305 = pneg %p304
      // Predicated region
      $region49: #{tpu_custom_call.1} parent=5 // pred_check
        _
      $region50: #{tpu_custom_call.1} parent=5 // pred_check_branch
        %307 = sbr.rel (%p304) target = $region52
      $region51: #{tpu_custom_call.1} parent=5 // pred_region
        %s308 = ssub.s32 %s18, 1
        // Predicated region
        $region53: #{tpu_custom_call.1} parent=51 // pred_check
          %p309 = pneg %p105
        $region54: #{tpu_custom_call.1} parent=51 // pred_check_branch
          %311 = sbr.rel (%p309) target = $region56
        $region55: #{tpu_custom_call.1} parent=51 // pred_region
          %312 = dma.done [#allocation5], 10240
        $region56: #{tpu_custom_call.1} parent=51 // pred_fallthru
          _
        %p313 = scmp.lt.s32.totalorder %s27, 1
        %s314 = scalar_select %p313, %s27, 1
        %s315 = smul.addr %s314, 4
        %s316 = scalar_lea.vmem %s0, %s315
        %p317 = pneg %p56
        %p318 = pneg %p53
        %p319 = scmp.lt.s32.totalorder %s27, 1
        %s320 = scalar_select %p319, %s27, 1
        %p321 = scmp.lt.s32.totalorder %s28, 0
        %s322 = scalar_select %p321, %s28, 0
        %s323 = smul.addr %s320, 4
        %s324 = sadd.s32 %s322, %s323
        %s325 = scalar_lea.vmem %s1, %s324
        %p326 = pneg %p84
        %p327 = pneg %p81
        %p328 = pneg %p105
        %p329 = pneg %p102
        %p330 = pneg %p126
        %p331 = pneg %p123
        %p332 = pneg %p147
        %p333 = pneg %p144
        %p334 = pneg %p168
        %p335 = pneg %p165
        %p336 = pneg %p189
        %p337 = pneg %p186
        %p338 = pneg %p210
        %p339 = pneg %p207
        %p340 = pneg %p238
        %p341 = pneg %p235
        %s342 = sand.u32 %s225, 1
        %s343 = scalar_lea.sflag [#allocation6], %s342
        %s344 = sand.u32 %s225, 1
        %s345 = smul.addr %s344, 8
        %s346 = scalar_lea.vmem [#allocation7], %s345
        %p347 = scmp.lt.s32.totalorder %s27, 1
        %s348 = scalar_select %p347, %s27, 1
        %s349 = smul.addr %s348, 4
        %s350 = scalar_lea.vmem %s0, %s349
        %p351 = scmp.lt.s32.totalorder %s27, 1
        %s352 = scalar_select %p351, %s27, 1
        %p353 = scmp.lt.s32.totalorder %s28, 0
        %s354 = scalar_select %p353, %s28, 0
        %s355 = smul.addr %s352, 4
        %s356 = sadd.s32 %s354, %s355
        %s357 = scalar_lea.vmem %s1, %s356
        %p358 = scmp.eq.s32.totalorder %s28, 0
        // Predicated region
        $region57: #{tpu_custom_call.1} parent=51 // pred_check
          %p359 = pneg %p358
        $region58: #{tpu_custom_call.1} parent=51 // pred_check_branch
          %361 = sbr.rel (%p359) target = $region60
        $region59: #{tpu_custom_call.1} parent=51 // pred_region
          %v362 = vld [vmem:[%s350] sm:$0xf]
          %v363 = vld [vmem:[%s4] sm:$0xff]
          %v364 = vld [vmem:[%s4 + $0x8] sm:$0xff]
          %v365 = vld [vmem:[%s4 + $0x10] sm:$0xff]
          %v366 = vld [vmem:[%s4 + $0x18] sm:$0xff]
          %v367 = vld [vmem:[%s4 + $0x20] sm:$0xff]
          %v368 = vld [vmem:[%s4 + $0x28] sm:$0xff]
          %v369 = vld [vmem:[%s3] sm:$0xff]
          %v370 = vld [vmem:[%s3 + $0x8] sm:$0xff]
          %v371 = vld [vmem:[%s3 + $0x10] sm:$0xff]
          %v372 = vld [vmem:[%s3 + $0x18] sm:$0xff]
          %v373 = vld [vmem:[%s3 + $0x20] sm:$0xff]
          %v374 = vld [vmem:[%s3 + $0x28] sm:$0xff]
          %v375 = vld [vmem:[%s3 + $0x30] sm:$0xff]
          %v376 = vld [vmem:[%s3 + $0x38] sm:$0xff]
          %v377 = vld [vmem:[%s3 + $0x40] sm:$0xff]
          %v378 = vld [vmem:[%s3 + $0x48] sm:$0xff]
          %v379 = vld [vmem:[%s3 + $0x50] sm:$0xff]
          %v380 = vld [vmem:[%s3 + $0x58] sm:$0xff]
          %v381 = vld [vmem:[%s3 + $0x60] sm:$0xff]
          %v382 = vld [vmem:[%s3 + $0x68] sm:$0xff]
          %v383 = vld [vmem:[%s3 + $0x70] sm:$0xff]
          %v384 = vld [vmem:[%s3 + $0x78] sm:$0xff]
          %385 = vmatprep.subr.mxu0 0.0
          %386 = vmatpush1.msra.mxu0 %v384
          %387 = vmatprep.subr.mxu0 0.0
          %388 = vmatpush1.msra.mxu0 %v383
          %389 = vmatprep.subr.mxu0 0.0
          %390 = vmatpush1.msra.mxu0 %v382
          %391 = vmatprep.subr.mxu0 0.0
          %392 = vmatpush1.msra.mxu0 %v381
          %393 = vmatprep.subr.mxu0 0.0
          %394 = vmatpush1.msra.mxu0 %v380
          %395 = vmatprep.subr.mxu0 0.0
          %396 = vmatpush1.msra.mxu0 %v379
          %397 = vmatprep.subr.mxu0 0.0
          %398 = vmatpush1.msra.mxu0 %v378
          %399 = vmatprep.subr.mxu0 0.0
          %400 = vmatpush1.msra.mxu0 %v377
          %401 = vmatprep.subr.mxu0 0.0
          %402 = vmatpush1.msra.mxu0 %v376
          %403 = vmatprep.subr.mxu0 0.0
          %404 = vmatpush1.msra.mxu0 %v375
          %405 = vmatprep.subr.mxu0 0.0
          %406 = vmatpush1.msra.mxu0 %v374
          %407 = vmatprep.subr.mxu0 0.0
          %408 = vmatpush1.msra.mxu0 %v373
          %409 = vmatprep.subr.mxu0 0.0
          %410 = vmatpush1.msra.mxu0 %v372
          %411 = vmatprep.subr.mxu0 0.0
          %412 = vmatpush1.msra.mxu0 %v371
          %413 = vmatprep.subr.mxu0 0.0
          %414 = vmatpush1.msra.mxu0 %v370
          %415 = vmatprep.subr.mxu0 0.0
          %416 = vmatpush1.msra.mxu0 %v369
          %417 = vmatprep.subr.mxu0 0.0
          %418 = vmatpush2.msra.mxu0 0.0
          %419 = vmatprep.subr.mxu0 0.0
          %420 = vmatpush2.msra.mxu0 0.0
          %421 = vmatprep.subr.mxu0 0.0
          %422 = vmatpush2.msra.mxu0 0.0
          %423 = vmatprep.subr.mxu0 0.0
          %424 = vmatpush2.msra.mxu0 0.0
          %425 = vmatprep.subr.mxu0 0.0
          %426 = vmatpush2.msra.mxu0 0.0
          %427 = vmatprep.subr.mxu0 0.0
          %428 = vmatpush2.msra.mxu0 0.0
          %429 = vmatprep.subr.mxu0 0.0
          %430 = vmatpush2.msra.mxu0 0.0
          %431 = vmatprep.subr.mxu0 0.0
          %432 = vmatpush2.msra.mxu0 0.0
          %433 = vmatprep.subr.mxu0 0.0
          %434 = vmatpush2.msra.mxu0 0.0
          %435 = vmatprep.subr.mxu0 0.0
          %436 = vmatpush2.msra.mxu0 0.0
          %437 = vmatprep.subr.mxu0 0.0
          %438 = vmatpush2.msra.mxu0 0.0
          %439 = vmatprep.subr.mxu0 0.0
          %440 = vmatpush2.msra.mxu0 0.0
          %441 = vmatprep.subr.mxu0 0.0
          %442 = vmatpush2.msra.mxu0 0.0
          %443 = vmatprep.subr.mxu0 0.0
          %444 = vmatpush2.msra.mxu0 0.0
          %445 = vmatprep.subr.mxu0 0.0
          %446 = vmatpush2.msra.mxu0 0.0
          %447 = vmatprep.subr.mxu0 0.0
          %448 = vmatpush2.msra.mxu0 0.0
          %449 = vmatprep.mubr.f32.mxu0 0.0
          %450 = vmatmul.mubr.f32.gmra.mxu0 %v362
          %v451 = vpop.f32.mrf.mxu0
          %v452 = vadd.f32 0.0, %v451
          %v453 = vpop.f32.mrf.mxu0
          %454 = vdwg.mxu0
          %456 = vrot.lane.b32.xlu0 %v452, 127
          %v457 = vpop.permute.xlu0 %456
          %vm458 = vcmask 31744
          %v460 = vsel %vm458, %v364, 0
          %vm462 = vcmask 1043456
          %v463 = vsel %vm462, %v457, 0
          %465 = vmatprep.subr.mxu0 0.0
          %466 = vmatpush1.msra.mxu0 0.0
          %467 = vmatprep.subr.mxu0 0.0
          %468 = vmatpush1.msra.mxu0 0.0
          %469 = vmatprep.subr.mxu0 0.0
          %470 = vmatpush1.msra.mxu0 0.0
          %471 = vmatprep.subr.mxu0 0.0
          %472 = vmatpush1.msra.mxu0 0.0
          %473 = vmatprep.subr.mxu0 0.0
          %474 = vmatpush1.msra.mxu0 0.0
          %475 = vmatprep.subr.mxu0 0.0
          %476 = vmatpush1.msra.mxu0 0.0
          %477 = vmatprep.subr.mxu0 0.0
          %478 = vmatpush1.msra.mxu0 0.0
          %479 = vmatprep.subr.mxu0 0.0
          %480 = vmatpush1.msra.mxu0 0.0
          %481 = vmatprep.subr.mxu0 0.0
          %482 = vmatpush1.msra.mxu0 0.0
          %483 = vmatprep.subr.mxu0 0.0
          %484 = vmatpush1.msra.mxu0 0.0
          %485 = vmatprep.subr.mxu0 0.0
          %486 = vmatpush1.msra.mxu0 0.0
          %487 = vmatprep.subr.mxu0 0.0
          %488 = vmatpush1.msra.mxu0 0.0
          %489 = vmatprep.subr.mxu0 0.0
          %490 = vmatpush1.msra.mxu0 0.0
          %491 = vmatprep.subr.mxu0 0.0
          %492 = vmatpush1.msra.mxu0 0.0
          %493 = vmatprep.subr.mxu0 0.0
          %494 = vmatpush1.msra.mxu0 0.0
          %495 = vmatprep.subr.mxu0 0.0
          %496 = vmatpush1.msra.mxu0 %v463
          %497 = vmatprep.subr.mxu0 0.0
          %498 = vmatpush2.msra.mxu0 0.0
          %499 = vmatprep.subr.mxu0 0.0
          %500 = vmatpush2.msra.mxu0 0.0
          %501 = vmatprep.subr.mxu0 0.0
          %502 = vmatpush2.msra.mxu0 0.0
          %503 = vmatprep.subr.mxu0 0.0
          %504 = vmatpush2.msra.mxu0 0.0
          %505 = vmatprep.subr.mxu0 0.0
          %506 = vmatpush2.msra.mxu0 0.0
          %507 = vmatprep.subr.mxu0 0.0
          %508 = vmatpush2.msra.mxu0 0.0
          %509 = vmatprep.subr.mxu0 0.0
          %510 = vmatpush2.msra.mxu0 0.0
          %511 = vmatprep.subr.mxu0 0.0
          %512 = vmatpush2.msra.mxu0 0.0
          %513 = vmatprep.subr.mxu0 0.0
          %514 = vmatpush2.msra.mxu0 0.0
          %515 = vmatprep.subr.mxu0 0.0
          %516 = vmatpush2.msra.mxu0 0.0
          %517 = vmatprep.subr.mxu0 0.0
          %518 = vmatpush2.msra.mxu0 0.0
          %519 = vmatprep.subr.mxu0 0.0
          %520 = vmatpush2.msra.mxu0 0.0
          %521 = vmatprep.subr.mxu0 0.0
          %522 = vmatpush2.msra.mxu0 0.0
          %523 = vmatprep.subr.mxu0 0.0
          %524 = vmatpush2.msra.mxu0 0.0
          %525 = vmatprep.subr.mxu0 0.0
          %526 = vmatpush2.msra.mxu0 0.0
          %527 = vmatprep.subr.mxu0 0.0
          %528 = vmatpush2.msra.mxu0 0.0
          %529 = vmatprep.mubr.f32.mxu0 0.0
          %530 = vmatmul.mubr.f32.gmra.mxu0 %v460
          %v531 = vpop.f32.mrf.mxu0
          %v532 = vadd.f32 0.0, %v531
          %v533 = vpop.f32.mrf.mxu0
          %534 = vdwg.mxu0
          %v536 = vsel %vm458, %v363, 0
          %v538 = vsel %vm462, %v452, 0
          %540 = vmatprep.subr.mxu0 0.0
          %541 = vmatpush1.msra.mxu0 0.0
          %542 = vmatprep.subr.mxu0 0.0
          %543 = vmatpush1.msra.mxu0 0.0
          %544 = vmatprep.subr.mxu0 0.0
          %545 = vmatpush1.msra.mxu0 0.0
          %546 = vmatprep.subr.mxu0 0.0
          %547 = vmatpush1.msra.mxu0 0.0
          %548 = vmatprep.subr.mxu0 0.0
          %549 = vmatpush1.msra.mxu0 0.0
          %550 = vmatprep.subr.mxu0 0.0
          %551 = vmatpush1.msra.mxu0 0.0
          %552 = vmatprep.subr.mxu0 0.0
          %553 = vmatpush1.msra.mxu0 0.0
          %554 = vmatprep.subr.mxu0 0.0
          %555 = vmatpush1.msra.mxu0 0.0
          %556 = vmatprep.subr.mxu0 0.0
          %557 = vmatpush1.msra.mxu0 0.0
          %558 = vmatprep.subr.mxu0 0.0
          %559 = vmatpush1.msra.mxu0 0.0
          %560 = vmatprep.subr.mxu0 0.0
          %561 = vmatpush1.msra.mxu0 0.0
          %562 = vmatprep.subr.mxu0 0.0
          %563 = vmatpush1.msra.mxu0 0.0
          %564 = vmatprep.subr.mxu0 0.0
          %565 = vmatpush1.msra.mxu0 0.0
          %566 = vmatprep.subr.mxu0 0.0
          %567 = vmatpush1.msra.mxu0 0.0
          %568 = vmatprep.subr.mxu0 0.0
          %569 = vmatpush1.msra.mxu0 0.0
          %570 = vmatprep.subr.mxu0 0.0
          %571 = vmatpush1.msra.mxu0 %v538
          %572 = vmatprep.subr.mxu0 0.0
          %573 = vmatpush2.msra.mxu0 0.0
          %574 = vmatprep.subr.mxu0 0.0
          %575 = vmatpush2.msra.mxu0 0.0
          %576 = vmatprep.subr.mxu0 0.0
          %577 = vmatpush2.msra.mxu0 0.0
          %578 = vmatprep.subr.mxu0 0.0
          %579 = vmatpush2.msra.mxu0 0.0
          %580 = vmatprep.subr.mxu0 0.0
          %581 = vmatpush2.msra.mxu0 0.0
          %582 = vmatprep.subr.mxu0 0.0
          %583 = vmatpush2.msra.mxu0 0.0
          %584 = vmatprep.subr.mxu0 0.0
          %585 = vmatpush2.msra.mxu0 0.0
          %586 = vmatprep.subr.mxu0 0.0
          %587 = vmatpush2.msra.mxu0 0.0
          %588 = vmatprep.subr.mxu0 0.0
          %589 = vmatpush2.msra.mxu0 0.0
          %590 = vmatprep.subr.mxu0 0.0
          %591 = vmatpush2.msra.mxu0 0.0
          %592 = vmatprep.subr.mxu0 0.0
          %593 = vmatpush2.msra.mxu0 0.0
          %594 = vmatprep.subr.mxu0 0.0
          %595 = vmatpush2.msra.mxu0 0.0
          %596 = vmatprep.subr.mxu0 0.0
          %597 = vmatpush2.msra.mxu0 0.0
          %598 = vmatprep.subr.mxu0 0.0
          %599 = vmatpush2.msra.mxu0 0.0
          %600 = vmatprep.subr.mxu0 0.0
          %601 = vmatpush2.msra.mxu0 0.0
          %602 = vmatprep.subr.mxu0 0.0
          %603 = vmatpush2.msra.mxu0 0.0
          %604 = vmatprep.mubr.f32.mxu0 0.0
          %605 = vmatmul.mubr.f32.gmra.mxu0 %v536
          %v606 = vpop.f32.mrf.mxu0
          %v607 = vadd.f32 %v532, %v606
          %v608 = vpop.f32.mrf.mxu0
          %609 = vdwg.mxu0
          %610 = vrot.lane.b32.xlu0 %v452, 126
          %v611 = vpop.permute.xlu0 %610
          %v613 = vsel %vm458, %v365, 0
          %v615 = vsel %vm462, %v611, 0
          %617 = vmatprep.subr.mxu0 0.0
          %618 = vmatpush1.msra.mxu0 0.0
          %619 = vmatprep.subr.mxu0 0.0
          %620 = vmatpush1.msra.mxu0 0.0
          %621 = vmatprep.subr.mxu0 0.0
          %622 = vmatpush1.msra.mxu0 0.0
          %623 = vmatprep.subr.mxu0 0.0
          %624 = vmatpush1.msra.mxu0 0.0
          %625 = vmatprep.subr.mxu0 0.0
          %626 = vmatpush1.msra.mxu0 0.0
          %627 = vmatprep.subr.mxu0 0.0
          %628 = vmatpush1.msra.mxu0 0.0
          %629 = vmatprep.subr.mxu0 0.0
          %630 = vmatpush1.msra.mxu0 0.0
          %631 = vmatprep.subr.mxu0 0.0
          %632 = vmatpush1.msra.mxu0 0.0
          %633 = vmatprep.subr.mxu0 0.0
          %634 = vmatpush1.msra.mxu0 0.0
          %635 = vmatprep.subr.mxu0 0.0
          %636 = vmatpush1.msra.mxu0 0.0
          %637 = vmatprep.subr.mxu0 0.0
          %638 = vmatpush1.msra.mxu0 0.0
          %639 = vmatprep.subr.mxu0 0.0
          %640 = vmatpush1.msra.mxu0 0.0
          %641 = vmatprep.subr.mxu0 0.0
          %642 = vmatpush1.msra.mxu0 0.0
          %643 = vmatprep.subr.mxu0 0.0
          %644 = vmatpush1.msra.mxu0 0.0
          %645 = vmatprep.subr.mxu0 0.0
          %646 = vmatpush1.msra.mxu0 0.0
          %647 = vmatprep.subr.mxu0 0.0
          %648 = vmatpush1.msra.mxu0 %v615
          %649 = vmatprep.subr.mxu0 0.0
          %650 = vmatpush2.msra.mxu0 0.0
          %651 = vmatprep.subr.mxu0 0.0
          %652 = vmatpush2.msra.mxu0 0.0
          %653 = vmatprep.subr.mxu0 0.0
          %654 = vmatpush2.msra.mxu0 0.0
          %655 = vmatprep.subr.mxu0 0.0
          %656 = vmatpush2.msra.mxu0 0.0
          %657 = vmatprep.subr.mxu0 0.0
          %658 = vmatpush2.msra.mxu0 0.0
          %659 = vmatprep.subr.mxu0 0.0
          %660 = vmatpush2.msra.mxu0 0.0
          %661 = vmatprep.subr.mxu0 0.0
          %662 = vmatpush2.msra.mxu0 0.0
          %663 = vmatprep.subr.mxu0 0.0
          %664 = vmatpush2.msra.mxu0 0.0
          %665 = vmatprep.subr.mxu0 0.0
          %666 = vmatpush2.msra.mxu0 0.0
          %667 = vmatprep.subr.mxu0 0.0
          %668 = vmatpush2.msra.mxu0 0.0
          %669 = vmatprep.subr.mxu0 0.0
          %670 = vmatpush2.msra.mxu0 0.0
          %671 = vmatprep.subr.mxu0 0.0
          %672 = vmatpush2.msra.mxu0 0.0
          %673 = vmatprep.subr.mxu0 0.0
          %674 = vmatpush2.msra.mxu0 0.0
          %675 = vmatprep.subr.mxu0 0.0
          %676 = vmatpush2.msra.mxu0 0.0
          %677 = vmatprep.subr.mxu0 0.0
          %678 = vmatpush2.msra.mxu0 0.0
          %679 = vmatprep.subr.mxu0 0.0
          %680 = vmatpush2.msra.mxu0 0.0
          %681 = vmatprep.mubr.f32.mxu0 0.0
          %682 = vmatmul.mubr.f32.gmra.mxu0 %v613
          %v683 = vpop.f32.mrf.mxu0
          %v684 = vadd.f32 0.0, %v683
          %v685 = vpop.f32.mrf.mxu0
          %686 = vdwg.mxu0
          %v687 = vadd.f32 %v607, %v684
          %688 = vrot.lane.b32.xlu0 %v452, 125
          %v689 = vpop.permute.xlu0 %688
          %v691 = vsel %vm458, %v366, 0
          %v693 = vsel %vm462, %v689, 0
          %695 = vmatprep.subr.mxu0 0.0
          %696 = vmatpush1.msra.mxu0 0.0
          %697 = vmatprep.subr.mxu0 0.0
          %698 = vmatpush1.msra.mxu0 0.0
          %699 = vmatprep.subr.mxu0 0.0
          %700 = vmatpush1.msra.mxu0 0.0
          %701 = vmatprep.subr.mxu0 0.0
          %702 = vmatpush1.msra.mxu0 0.0
          %703 = vmatprep.subr.mxu0 0.0
          %704 = vmatpush1.msra.mxu0 0.0
          %705 = vmatprep.subr.mxu0 0.0
          %706 = vmatpush1.msra.mxu0 0.0
          %707 = vmatprep.subr.mxu0 0.0
          %708 = vmatpush1.msra.mxu0 0.0
          %709 = vmatprep.subr.mxu0 0.0
          %710 = vmatpush1.msra.mxu0 0.0
          %711 = vmatprep.subr.mxu0 0.0
          %712 = vmatpush1.msra.mxu0 0.0
          %713 = vmatprep.subr.mxu0 0.0
          %714 = vmatpush1.msra.mxu0 0.0
          %715 = vmatprep.subr.mxu0 0.0
          %716 = vmatpush1.msra.mxu0 0.0
          %717 = vmatprep.subr.mxu0 0.0
          %718 = vmatpush1.msra.mxu0 0.0
          %719 = vmatprep.subr.mxu0 0.0
          %720 = vmatpush1.msra.mxu0 0.0
          %721 = vmatprep.subr.mxu0 0.0
          %722 = vmatpush1.msra.mxu0 0.0
          %723 = vmatprep.subr.mxu0 0.0
          %724 = vmatpush1.msra.mxu0 0.0
          %725 = vmatprep.subr.mxu0 0.0
          %726 = vmatpush1.msra.mxu0 %v693
          %727 = vmatprep.subr.mxu0 0.0
          %728 = vmatpush2.msra.mxu0 0.0
          %729 = vmatprep.subr.mxu0 0.0
          %730 = vmatpush2.msra.mxu0 0.0
          %731 = vmatprep.subr.mxu0 0.0
          %732 = vmatpush2.msra.mxu0 0.0
          %733 = vmatprep.subr.mxu0 0.0
          %734 = vmatpush2.msra.mxu0 0.0
          %735 = vmatprep.subr.mxu0 0.0
          %736 = vmatpush2.msra.mxu0 0.0
          %737 = vmatprep.subr.mxu0 0.0
          %738 = vmatpush2.msra.mxu0 0.0
          %739 = vmatprep.subr.mxu0 0.0
          %740 = vmatpush2.msra.mxu0 0.0
          %741 = vmatprep.subr.mxu0 0.0
          %742 = vmatpush2.msra.mxu0 0.0
          %743 = vmatprep.subr.mxu0 0.0
          %744 = vmatpush2.msra.mxu0 0.0
          %745 = vmatprep.subr.mxu0 0.0
          %746 = vmatpush2.msra.mxu0 0.0
          %747 = vmatprep.subr.mxu0 0.0
          %748 = vmatpush2.msra.mxu0 0.0
          %749 = vmatprep.subr.mxu0 0.0
          %750 = vmatpush2.msra.mxu0 0.0
          %751 = vmatprep.subr.mxu0 0.0
          %752 = vmatpush2.msra.mxu0 0.0
          %753 = vmatprep.subr.mxu0 0.0
          %754 = vmatpush2.msra.mxu0 0.0
          %755 = vmatprep.subr.mxu0 0.0
          %756 = vmatpush2.msra.mxu0 0.0
          %757 = vmatprep.subr.mxu0 0.0
          %758 = vmatpush2.msra.mxu0 0.0
          %759 = vmatprep.mubr.f32.mxu0 0.0
          %760 = vmatmul.mubr.f32.gmra.mxu0 %v691
          %v761 = vpop.f32.mrf.mxu0
          %v762 = vadd.f32 0.0, %v761
          %v763 = vpop.f32.mrf.mxu0
          %764 = vdwg.mxu0
          %v765 = vadd.f32 %v687, %v762
          %766 = vrot.lane.b32.xlu0 %v452, 124
          %v767 = vpop.permute.xlu0 %766
          %v769 = vsel %vm458, %v367, 0
          %v771 = vsel %vm462, %v767, 0
          %773 = vmatprep.subr.mxu0 0.0
          %774 = vmatpush1.msra.mxu0 0.0
          %775 = vmatprep.subr.mxu0 0.0
          %776 = vmatpush1.msra.mxu0 0.0
          %777 = vmatprep.subr.mxu0 0.0
          %778 = vmatpush1.msra.mxu0 0.0
          %779 = vmatprep.subr.mxu0 0.0
          %780 = vmatpush1.msra.mxu0 0.0
          %781 = vmatprep.subr.mxu0 0.0
          %782 = vmatpush1.msra.mxu0 0.0
          %783 = vmatprep.subr.mxu0 0.0
          %784 = vmatpush1.msra.mxu0 0.0
          %785 = vmatprep.subr.mxu0 0.0
          %786 = vmatpush1.msra.mxu0 0.0
          %787 = vmatprep.subr.mxu0 0.0
          %788 = vmatpush1.msra.mxu0 0.0
          %789 = vmatprep.subr.mxu0 0.0
          %790 = vmatpush1.msra.mxu0 0.0
          %791 = vmatprep.subr.mxu0 0.0
          %792 = vmatpush1.msra.mxu0 0.0
          %793 = vmatprep.subr.mxu0 0.0
          %794 = vmatpush1.msra.mxu0 0.0
          %795 = vmatprep.subr.mxu0 0.0
          %796 = vmatpush1.msra.mxu0 0.0
          %797 = vmatprep.subr.mxu0 0.0
          %798 = vmatpush1.msra.mxu0 0.0
          %799 = vmatprep.subr.mxu0 0.0
          %800 = vmatpush1.msra.mxu0 0.0
          %801 = vmatprep.subr.mxu0 0.0
          %802 = vmatpush1.msra.mxu0 0.0
          %803 = vmatprep.subr.mxu0 0.0
          %804 = vmatpush1.msra.mxu0 %v771
          %805 = vmatprep.subr.mxu0 0.0
          %806 = vmatpush2.msra.mxu0 0.0
          %807 = vmatprep.subr.mxu0 0.0
          %808 = vmatpush2.msra.mxu0 0.0
          %809 = vmatprep.subr.mxu0 0.0
          %810 = vmatpush2.msra.mxu0 0.0
          %811 = vmatprep.subr.mxu0 0.0
          %812 = vmatpush2.msra.mxu0 0.0
          %813 = vmatprep.subr.mxu0 0.0
          %814 = vmatpush2.msra.mxu0 0.0
          %815 = vmatprep.subr.mxu0 0.0
          %816 = vmatpush2.msra.mxu0 0.0
          %817 = vmatprep.subr.mxu0 0.0
          %818 = vmatpush2.msra.mxu0 0.0
          %819 = vmatprep.subr.mxu0 0.0
          %820 = vmatpush2.msra.mxu0 0.0
          %821 = vmatprep.subr.mxu0 0.0
          %822 = vmatpush2.msra.mxu0 0.0
          %823 = vmatprep.subr.mxu0 0.0
          %824 = vmatpush2.msra.mxu0 0.0
          %825 = vmatprep.subr.mxu0 0.0
          %826 = vmatpush2.msra.mxu0 0.0
          %827 = vmatprep.subr.mxu0 0.0
          %828 = vmatpush2.msra.mxu0 0.0
          %829 = vmatprep.subr.mxu0 0.0
          %830 = vmatpush2.msra.mxu0 0.0
          %831 = vmatprep.subr.mxu0 0.0
          %832 = vmatpush2.msra.mxu0 0.0
          %833 = vmatprep.subr.mxu0 0.0
          %834 = vmatpush2.msra.mxu0 0.0
          %835 = vmatprep.subr.mxu0 0.0
          %836 = vmatpush2.msra.mxu0 0.0
          %837 = vmatprep.mubr.f32.mxu0 0.0
          %838 = vmatmul.mubr.f32.gmra.mxu0 %v769
          %v839 = vpop.f32.mrf.mxu0
          %v840 = vadd.f32 0.0, %v839
          %v841 = vpop.f32.mrf.mxu0
          %842 = vdwg.mxu0
          %v843 = vadd.f32 %v765, %v840
          %v844 = vld [vmem:[%s5] sm:$0xf]
          %846 = vrot.lane.b32.xlu0 %v844, 120
          %v847 = vpop.permute.xlu0 %846
          %vm849 = vcmask 64512
          %v850 = vsel %vm849, %v844, 0
          %852 = vmatprep.subr.mxu0 0.0
          %853 = vmatpush1.msra.mxu0 0.0
          %854 = vmatprep.subr.mxu0 0.0
          %855 = vmatpush1.msra.mxu0 0.0
          %856 = vmatprep.subr.mxu0 0.0
          %857 = vmatpush1.msra.mxu0 0.0
          %858 = vmatprep.subr.mxu0 0.0
          %859 = vmatpush1.msra.mxu0 0.0
          %860 = vmatprep.subr.mxu0 0.0
          %861 = vmatpush1.msra.mxu0 0.0
          %862 = vmatprep.subr.mxu0 0.0
          %863 = vmatpush1.msra.mxu0 0.0
          %864 = vmatprep.subr.mxu0 0.0
          %865 = vmatpush1.msra.mxu0 0.0
          %866 = vmatprep.subr.mxu0 0.0
          %867 = vmatpush1.msra.mxu0 0.0
          %868 = vmatprep.subr.mxu0 0.0
          %869 = vmatpush1.msra.mxu0 0.0
          %870 = vmatprep.subr.mxu0 0.0
          %871 = vmatpush1.msra.mxu0 0.0
          %872 = vmatprep.subr.mxu0 0.0
          %873 = vmatpush1.msra.mxu0 0.0
          %874 = vmatprep.subr.mxu0 0.0
          %875 = vmatpush1.msra.mxu0 0.0
          %876 = vmatprep.subr.mxu0 0.0
          %877 = vmatpush1.msra.mxu0 0.0
          %878 = vmatprep.subr.mxu0 0.0
          %879 = vmatpush1.msra.mxu0 0.0
          %880 = vmatprep.subr.mxu0 0.0
          %881 = vmatpush1.msra.mxu0 0.0
          %882 = vmatprep.subr.mxu0 0.0
          %883 = vmatpush1.msra.mxu0 %v843
          %884 = vmatprep.subr.mxu0 0.0
          %885 = vmatpush2.msra.mxu0 0.0
          %886 = vmatprep.subr.mxu0 0.0
          %887 = vmatpush2.msra.mxu0 0.0
          %888 = vmatprep.subr.mxu0 0.0
          %889 = vmatpush2.msra.mxu0 0.0
          %890 = vmatprep.subr.mxu0 0.0
          %891 = vmatpush2.msra.mxu0 0.0
          %892 = vmatprep.subr.mxu0 0.0
          %893 = vmatpush2.msra.mxu0 0.0
          %894 = vmatprep.subr.mxu0 0.0
          %895 = vmatpush2.msra.mxu0 0.0
          %896 = vmatprep.subr.mxu0 0.0
          %897 = vmatpush2.msra.mxu0 0.0
          %898 = vmatprep.subr.mxu0 0.0
          %899 = vmatpush2.msra.mxu0 0.0
          %900 = vmatprep.subr.mxu0 0.0
          %901 = vmatpush2.msra.mxu0 0.0
          %902 = vmatprep.subr.mxu0 0.0
          %903 = vmatpush2.msra.mxu0 0.0
          %904 = vmatprep.subr.mxu0 0.0
          %905 = vmatpush2.msra.mxu0 0.0
          %906 = vmatprep.subr.mxu0 0.0
          %907 = vmatpush2.msra.mxu0 0.0
          %908 = vmatprep.subr.mxu0 0.0
          %909 = vmatpush2.msra.mxu0 0.0
          %910 = vmatprep.subr.mxu0 0.0
          %911 = vmatpush2.msra.mxu0 0.0
          %912 = vmatprep.subr.mxu0 0.0
          %913 = vmatpush2.msra.mxu0 0.0
          %914 = vmatprep.subr.mxu0 0.0
          %915 = vmatpush2.msra.mxu0 0.0
          %916 = vmatprep.mubr.f32.mxu0 0.0
          %917 = vmatmul.mubr.f32.gmra.mxu0 %v850
          %v918 = vpop.f32.mrf.mxu0
          %v919 = vadd.f32 %v847, %v918
          %v920 = vpop.f32.mrf.mxu0
          %921 = vdwg.mxu0
          %v922 = vld [vmem:[%s6] sm:$0xff]
          %v923 = vld [vmem:[%s6 + $0x8] sm:$0xff]
          %v924 = vld [vmem:[%s6 + $0x10] sm:$0xff]
          %v926 = vsel %vm458, %v922, 0
          %v929 = vsel %vm462, %v919, 0
          %931 = vmatprep.subr.mxu0 0.0
          %932 = vmatpush1.msra.mxu0 0.0
          %933 = vmatprep.subr.mxu0 0.0
          %934 = vmatpush1.msra.mxu0 0.0
          %935 = vmatprep.subr.mxu0 0.0
          %936 = vmatpush1.msra.mxu0 0.0
          %937 = vmatprep.subr.mxu0 0.0
          %938 = vmatpush1.msra.mxu0 0.0
          %939 = vmatprep.subr.mxu0 0.0
          %940 = vmatpush1.msra.mxu0 0.0
          %941 = vmatprep.subr.mxu0 0.0
          %942 = vmatpush1.msra.mxu0 0.0
          %943 = vmatprep.subr.mxu0 0.0
          %944 = vmatpush1.msra.mxu0 0.0
          %945 = vmatprep.subr.mxu0 0.0
          %946 = vmatpush1.msra.mxu0 0.0
          %947 = vmatprep.subr.mxu0 0.0
          %948 = vmatpush1.msra.mxu0 0.0
          %949 = vmatprep.subr.mxu0 0.0
          %950 = vmatpush1.msra.mxu0 0.0
          %951 = vmatprep.subr.mxu0 0.0
          %952 = vmatpush1.msra.mxu0 0.0
          %953 = vmatprep.subr.mxu0 0.0
          %954 = vmatpush1.msra.mxu0 0.0
          %955 = vmatprep.subr.mxu0 0.0
          %956 = vmatpush1.msra.mxu0 0.0
          %957 = vmatprep.subr.mxu0 0.0
          %958 = vmatpush1.msra.mxu0 0.0
          %959 = vmatprep.subr.mxu0 0.0
          %960 = vmatpush1.msra.mxu0 0.0
          %961 = vmatprep.subr.mxu0 0.0
          %962 = vmatpush1.msra.mxu0 %v929
          %963 = vmatprep.subr.mxu0 0.0
          %964 = vmatpush2.msra.mxu0 0.0
          %965 = vmatprep.subr.mxu0 0.0
          %966 = vmatpush2.msra.mxu0 0.0
          %967 = vmatprep.subr.mxu0 0.0
          %968 = vmatpush2.msra.mxu0 0.0
          %969 = vmatprep.subr.mxu0 0.0
          %970 = vmatpush2.msra.mxu0 0.0
          %971 = vmatprep.subr.mxu0 0.0
          %972 = vmatpush2.msra.mxu0 0.0
          %973 = vmatprep.subr.mxu0 0.0
          %974 = vmatpush2.msra.mxu0 0.0
          %975 = vmatprep.subr.mxu0 0.0
          %976 = vmatpush2.msra.mxu0 0.0
          %977 = vmatprep.subr.mxu0 0.0
          %978 = vmatpush2.msra.mxu0 0.0
          %979 = vmatprep.subr.mxu0 0.0
          %980 = vmatpush2.msra.mxu0 0.0
          %981 = vmatprep.subr.mxu0 0.0
          %982 = vmatpush2.msra.mxu0 0.0
          %983 = vmatprep.subr.mxu0 0.0
          %984 = vmatpush2.msra.mxu0 0.0
          %985 = vmatprep.subr.mxu0 0.0
          %986 = vmatpush2.msra.mxu0 0.0
          %987 = vmatprep.subr.mxu0 0.0
          %988 = vmatpush2.msra.mxu0 0.0
          %989 = vmatprep.subr.mxu0 0.0
          %990 = vmatpush2.msra.mxu0 0.0
          %991 = vmatprep.subr.mxu0 0.0
          %992 = vmatpush2.msra.mxu0 0.0
          %993 = vmatprep.subr.mxu0 0.0
          %994 = vmatpush2.msra.mxu0 0.0
          %995 = vmatprep.mubr.f32.mxu0 0.0
          %996 = vmatmul.mubr.f32.gmra.mxu0 %v926
          %v997 = vpop.f32.mrf.mxu0
          %v998 = vadd.f32 0.0, %v997
          %v999 = vpop.f32.mrf.mxu0
          %1000 = vdwg.mxu0
          %v1002 = vsel %vm458, %v923, 0
          %1004 = vmatprep.subr.mxu0 0.0
          %1005 = vmatpush1.msra.mxu0 0.0
          %1006 = vmatprep.subr.mxu0 0.0
          %1007 = vmatpush1.msra.mxu0 0.0
          %1008 = vmatprep.subr.mxu0 0.0
          %1009 = vmatpush1.msra.mxu0 0.0
          %1010 = vmatprep.subr.mxu0 0.0
          %1011 = vmatpush1.msra.mxu0 0.0
          %1012 = vmatprep.subr.mxu0 0.0
          %1013 = vmatpush1.msra.mxu0 0.0
          %1014 = vmatprep.subr.mxu0 0.0
          %1015 = vmatpush1.msra.mxu0 0.0
          %1016 = vmatprep.subr.mxu0 0.0
          %1017 = vmatpush1.msra.mxu0 0.0
          %1018 = vmatprep.subr.mxu0 0.0
          %1019 = vmatpush1.msra.mxu0 0.0
          %1020 = vmatprep.subr.mxu0 0.0
          %1021 = vmatpush1.msra.mxu0 0.0
          %1022 = vmatprep.subr.mxu0 0.0
          %1023 = vmatpush1.msra.mxu0 0.0
          %1024 = vmatprep.subr.mxu0 0.0
          %1025 = vmatpush1.msra.mxu0 0.0
          %1026 = vmatprep.subr.mxu0 0.0
          %1027 = vmatpush1.msra.mxu0 0.0
          %1028 = vmatprep.subr.mxu0 0.0
          %1029 = vmatpush1.msra.mxu0 0.0
          %1030 = vmatprep.subr.mxu0 0.0
          %1031 = vmatpush1.msra.mxu0 0.0
          %1032 = vmatprep.subr.mxu0 0.0
          %1033 = vmatpush1.msra.mxu0 0.0
          %1034 = vmatprep.subr.mxu0 0.0
          %1035 = vmatpush1.msra.mxu0 %v929
          %1036 = vmatprep.subr.mxu0 0.0
          %1037 = vmatpush2.msra.mxu0 0.0
          %1038 = vmatprep.subr.mxu0 0.0
          %1039 = vmatpush2.msra.mxu0 0.0
          %1040 = vmatprep.subr.mxu0 0.0
          %1041 = vmatpush2.msra.mxu0 0.0
          %1042 = vmatprep.subr.mxu0 0.0
          %1043 = vmatpush2.msra.mxu0 0.0
          %1044 = vmatprep.subr.mxu0 0.0
          %1045 = vmatpush2.msra.mxu0 0.0
          %1046 = vmatprep.subr.mxu0 0.0
          %1047 = vmatpush2.msra.mxu0 0.0
          %1048 = vmatprep.subr.mxu0 0.0
          %1049 = vmatpush2.msra.mxu0 0.0
          %1050 = vmatprep.subr.mxu0 0.0
          %1051 = vmatpush2.msra.mxu0 0.0
          %1052 = vmatprep.subr.mxu0 0.0
          %1053 = vmatpush2.msra.mxu0 0.0
          %1054 = vmatprep.subr.mxu0 0.0
          %1055 = vmatpush2.msra.mxu0 0.0
          %1056 = vmatprep.subr.mxu0 0.0
          %1057 = vmatpush2.msra.mxu0 0.0
          %1058 = vmatprep.subr.mxu0 0.0
          %1059 = vmatpush2.msra.mxu0 0.0
          %1060 = vmatprep.subr.mxu0 0.0
          %1061 = vmatpush2.msra.mxu0 0.0
          %1062 = vmatprep.subr.mxu0 0.0
          %1063 = vmatpush2.msra.mxu0 0.0
          %1064 = vmatprep.subr.mxu0 0.0
          %1065 = vmatpush2.msra.mxu0 0.0
          %1066 = vmatprep.subr.mxu0 0.0
          %1067 = vmatpush2.msra.mxu0 0.0
          %1068 = vmatprep.mubr.f32.mxu0 0.0
          %1069 = vmatmul.mubr.f32.gmra.mxu0 %v1002
          %v1070 = vpop.f32.mrf.mxu0
          %v1071 = vadd.f32 0.0, %v1070
          %v1072 = vpop.f32.mrf.mxu0
          %1073 = vdwg.mxu0
          %v1075 = vsel %vm458, %v924, 0
          %1077 = vmatprep.subr.mxu0 0.0
          %1078 = vmatpush1.msra.mxu0 0.0
          %1079 = vmatprep.subr.mxu0 0.0
          %1080 = vmatpush1.msra.mxu0 0.0
          %1081 = vmatprep.subr.mxu0 0.0
          %1082 = vmatpush1.msra.mxu0 0.0
          %1083 = vmatprep.subr.mxu0 0.0
          %1084 = vmatpush1.msra.mxu0 0.0
          %1085 = vmatprep.subr.mxu0 0.0
          %1086 = vmatpush1.msra.mxu0 0.0
          %1087 = vmatprep.subr.mxu0 0.0
          %1088 = vmatpush1.msra.mxu0 0.0
          %1089 = vmatprep.subr.mxu0 0.0
          %1090 = vmatpush1.msra.mxu0 0.0
          %1091 = vmatprep.subr.mxu0 0.0
          %1092 = vmatpush1.msra.mxu0 0.0
          %1093 = vmatprep.subr.mxu0 0.0
          %1094 = vmatpush1.msra.mxu0 0.0
          %1095 = vmatprep.subr.mxu0 0.0
          %1096 = vmatpush1.msra.mxu0 0.0
          %1097 = vmatprep.subr.mxu0 0.0
          %1098 = vmatpush1.msra.mxu0 0.0
          %1099 = vmatprep.subr.mxu0 0.0
          %1100 = vmatpush1.msra.mxu0 0.0
          %1101 = vmatprep.subr.mxu0 0.0
          %1102 = vmatpush1.msra.mxu0 0.0
          %1103 = vmatprep.subr.mxu0 0.0
          %1104 = vmatpush1.msra.mxu0 0.0
          %1105 = vmatprep.subr.mxu0 0.0
          %1106 = vmatpush1.msra.mxu0 0.0
          %1107 = vmatprep.subr.mxu0 0.0
          %1108 = vmatpush1.msra.mxu0 %v929
          %1109 = vmatprep.subr.mxu0 0.0
          %1110 = vmatpush2.msra.mxu0 0.0
          %1111 = vmatprep.subr.mxu0 0.0
          %1112 = vmatpush2.msra.mxu0 0.0
          %1113 = vmatprep.subr.mxu0 0.0
          %1114 = vmatpush2.msra.mxu0 0.0
          %1115 = vmatprep.subr.mxu0 0.0
          %1116 = vmatpush2.msra.mxu0 0.0
          %1117 = vmatprep.subr.mxu0 0.0
          %1118 = vmatpush2.msra.mxu0 0.0
          %1119 = vmatprep.subr.mxu0 0.0
          %1120 = vmatpush2.msra.mxu0 0.0
          %1121 = vmatprep.subr.mxu0 0.0
          %1122 = vmatpush2.msra.mxu0 0.0
          %1123 = vmatprep.subr.mxu0 0.0
          %1124 = vmatpush2.msra.mxu0 0.0
          %1125 = vmatprep.subr.mxu0 0.0
          %1126 = vmatpush2.msra.mxu0 0.0
          %1127 = vmatprep.subr.mxu0 0.0
          %1128 = vmatpush2.msra.mxu0 0.0
          %1129 = vmatprep.subr.mxu0 0.0
          %1130 = vmatpush2.msra.mxu0 0.0
          %1131 = vmatprep.subr.mxu0 0.0
          %1132 = vmatpush2.msra.mxu0 0.0
          %1133 = vmatprep.subr.mxu0 0.0
          %1134 = vmatpush2.msra.mxu0 0.0
          %1135 = vmatprep.subr.mxu0 0.0
          %1136 = vmatpush2.msra.mxu0 0.0
          %1137 = vmatprep.subr.mxu0 0.0
          %1138 = vmatpush2.msra.mxu0 0.0
          %1139 = vmatprep.subr.mxu0 0.0
          %1140 = vmatpush2.msra.mxu0 0.0
          %1141 = vmatprep.mubr.f32.mxu0 0.0
          %1142 = vmatmul.mubr.f32.gmra.mxu0 %v1075
          %v1143 = vpop.f32.mrf.mxu0
          %v1144 = vadd.f32 0.0, %v1143
          %v1145 = vpop.f32.mrf.mxu0
          %1146 = vdwg.mxu0
          %1148 = vrot.lane.b32.xlu0 %v1071, 1
          %v1149 = vpop.permute.xlu0 %1148
          %1152 = vrot.lane.b32.xlu0 %v1144, 2
          %v1153 = vpop.permute.xlu0 %1152
          %vm1155 = vcmask 7168
          %v1156 = vsel %vm1155, %v998, %v1149
          %vm1157 = vcmask 15360
          %v1158 = vsel %vm1157, %v1156, %v1153
          %v1159 = vld [vmem:[%s7] sm:$0xff]
          %1161 = vrot.lane.b32.xlu0 %v1159, 123
          %v1162 = vpop.permute.xlu0 %1161
          %v1164 = vadd.f32 %v1158, %v1162
          %vm1165 = vcmask 23552
          %v1166 = vsel %vm1165, %v1164, -inf
          %1167 = vmax.xlane.f32.xlu0 %v1166
          %v1168 = vpop.xlane.xlu0 %1167
          %v1169 = vsub.f32 %v1164, %v1168
          %v1170 = vmul.f32 %v1169, 1.442695
          %v1171 = vpow.pop %v1170
          %v1172 = vsel %vm1165, %v1171, 0.0
          %1173 = vadd.xlane.f32.xlu0 %v1172
          %v1174 = vpop.xlane.xlu0 %1173
          %v1175 = vrcp.pop %v1174
          %v1176 = vmul.f32 %v1171, %v1175
          %1177 = vset.pattern.permute.xlu0 3
          %1178 = vperm.xlu0 %1177, %v1159
          %v1179 = vpop.permute.xlu0 %1178
          %v1181 = vmul.f32 %v1176, %v1179
          %v1182 = vmul.f32 %v1181, %v1159
          %v1183 = vsel %vm1165, %v1182, 0.0
          %1184 = vadd.xlane.f32.xlu0 %v1183
          %v1185 = vpop.xlane.xlu0 %1184
          %v1186 = vadd.f32 %v1185, %v1159
          %1188 = vrot.lane.b32.xlu0 %v1186, 124
          %v1189 = vpop.permute.xlu0 %1188
          %1191 = vst.msk [vmem:[#allocation3] sm:$0xff] %vm1155, %v1189
          %1193 = vrot.lane.b32.xlu0 %v1181, 127
          %v1194 = vpop.permute.xlu0 %1193
          %1195 = vrot.lane.b32.xlu0 %v1181, 126
          %v1196 = vpop.permute.xlu0 %1195
          %1197 = vset.pattern.permute.xlu0 0
          %1198 = vperm.xlu0 %1197, %v1181
          %v1199 = vpop.permute.xlu0 %1198
          %1201 = vset.pattern.permute.xlu0 0
          %1202 = vperm.xlu0 %1201, %v1194
          %v1203 = vpop.permute.xlu0 %1202
          %1205 = vset.pattern.permute.xlu0 0
          %1206 = vperm.xlu0 %1205, %v1196
          %v1207 = vpop.permute.xlu0 %1206
          %1210 = vset.pattern.permute.xlu0 0
          %1211 = vperm.xlu0 %1210, 1.0
          %v1212 = vpop.permute.xlu0 %1211
          %v1214 = vmul.f32 %v363, %v1199
          %v1215 = vmul.f32 %v364, %v1199
          %v1216 = vmul.f32 %v365, %v1199
          %v1217 = vmul.f32 %v366, %v1203
          %v1218 = vmul.f32 %v367, %v1207
          %v1219 = vmul.f32 %v368, %v1212
          %1220 = vst.msk [vmem:[#allocation2] sm:$0xff] %vm458, %v1214
          %1221 = vst.msk [vmem:[#allocation2 + $0x8] sm:$0xff] %vm458, %v1215
          %1222 = vst.msk [vmem:[#allocation2 + $0x10] sm:$0xff] %vm458, %v1216
          %1223 = vst.msk [vmem:[#allocation2 + $0x18] sm:$0xff] %vm458, %v1217
          %1224 = vst.msk [vmem:[#allocation2 + $0x20] sm:$0xff] %vm458, %v1218
          %1225 = vst.msk [vmem:[#allocation2 + $0x28] sm:$0xff] %vm458, %v1219
        $region60: #{tpu_custom_call.1} parent=51 // pred_fallthru
          _
        %v1226 = vld [vmem:[%s357] sm:$0x1]
        %v1227 = vld [vmem:[%s357 + $0x1] sm:$0x1]
        %v1228 = vld [vmem:[%s357 + $0x2] sm:$0x1]
        %v1229 = vld [vmem:[%s357 + $0x3] sm:$0x1]
        %v1230 = vld [vmem:[#allocation4] sm:$0xff]
        %v1231 = vld [vmem:[#allocation4 + $0x8] sm:$0xff]
        %v1232 = vld [vmem:[#allocation4 + $0x10] sm:$0xff]
        %v1233 = vld [vmem:[#allocation4 + $0x18] sm:$0xff]
        %v1234 = vld [vmem:[#allocation4 + $0x20] sm:$0xff]
        %v1235 = vld [vmem:[#allocation4 + $0x28] sm:$0xff]
        %v1236 = vld [vmem:[#allocation4 + $0x30] sm:$0xff]
        %v1237 = vld [vmem:[#allocation4 + $0x38] sm:$0xff]
        %v1238 = vld [vmem:[#allocation4 + $0x40] sm:$0xff]
        %v1239 = vld [vmem:[#allocation4 + $0x48] sm:$0xff]
        %v1240 = vld [vmem:[#allocation4 + $0x50] sm:$0xff]
        %v1241 = vld [vmem:[#allocation4 + $0x58] sm:$0xff]
        %v1242 = vld [vmem:[#allocation4 + $0x60] sm:$0xff]
        %v1243 = vld [vmem:[#allocation4 + $0x68] sm:$0xff]
        %v1244 = vld [vmem:[#allocation4 + $0x70] sm:$0xff]
        %v1245 = vld [vmem:[#allocation4 + $0x78] sm:$0xff]
        %v1246 = vld [vmem:[#allocation4 + $0x80] sm:$0xff]
        %v1247 = vld [vmem:[#allocation4 + $0x88] sm:$0xff]
        %v1248 = vld [vmem:[#allocation4 + $0x90] sm:$0xff]
        %v1249 = vld [vmem:[#allocation4 + $0x98] sm:$0xff]
        %v1250 = vld [vmem:[#allocation4 + $0xa0] sm:$0xff]
        %v1251 = vld [vmem:[#allocation4 + $0xa8] sm:$0xff]
        %v1252 = vld [vmem:[#allocation4 + $0xb0] sm:$0xff]
        %v1253 = vld [vmem:[#allocation4 + $0xb8] sm:$0xff]
        %v1254 = vld [vmem:[#allocation4 + $0xc0] sm:$0xff]
        %v1255 = vld [vmem:[#allocation4 + $0xc8] sm:$0xff]
        %v1256 = vld [vmem:[#allocation4 + $0xd0] sm:$0xff]
        %v1257 = vld [vmem:[#allocation4 + $0xd8] sm:$0xff]
        %v1258 = vld [vmem:[#allocation4 + $0xe0] sm:$0xff]
        %v1259 = vld [vmem:[#allocation4 + $0xe8] sm:$0xff]
        %v1260 = vld [vmem:[#allocation4 + $0xf0] sm:$0xff]
        %v1261 = vld [vmem:[#allocation4 + $0xf8] sm:$0xff]
        %v1262 = vld [vmem:[#allocation4 + $0x100] sm:$0xff]
        %v1263 = vld [vmem:[#allocation4 + $0x108] sm:$0xff]
        %v1264 = vld [vmem:[#allocation4 + $0x110] sm:$0xff]
        %v1265 = vld [vmem:[#allocation4 + $0x118] sm:$0xff]
        %v1266 = vld [vmem:[#allocation4 + $0x120] sm:$0xff]
        %v1267 = vld [vmem:[#allocation4 + $0x128] sm:$0xff]
        %v1268 = vld [vmem:[#allocation4 + $0x130] sm:$0xff]
        %v1269 = vld [vmem:[#allocation4 + $0x138] sm:$0xff]
        %v1270 = vld [vmem:[#allocation4 + $0x140] sm:$0xff]
        %v1271 = vld [vmem:[#allocation4 + $0x148] sm:$0xff]
        %v1272 = vld [vmem:[#allocation4 + $0x150] sm:$0xff]
        %v1273 = vld [vmem:[#allocation4 + $0x158] sm:$0xff]
        %v1274 = vld [vmem:[#allocation4 + $0x160] sm:$0xff]
        %v1275 = vld [vmem:[#allocation4 + $0x168] sm:$0xff]
        %v1276 = vld [vmem:[#allocation4 + $0x170] sm:$0xff]
        %v1277 = vld [vmem:[#allocation4 + $0x178] sm:$0xff]
        %v1278 = vld [vmem:[#allocation4 + $0x180] sm:$0xff]
        %v1279 = vld [vmem:[#allocation4 + $0x188] sm:$0xff]
        %v1280 = vld [vmem:[#allocation4 + $0x190] sm:$0xff]
        %v1281 = vld [vmem:[#allocation4 + $0x198] sm:$0xff]
        %v1282 = vld [vmem:[#allocation4 + $0x1a0] sm:$0xff]
        %v1283 = vld [vmem:[#allocation4 + $0x1a8] sm:$0xff]
        %v1284 = vld [vmem:[#allocation4 + $0x1b0] sm:$0xff]
        %v1285 = vld [vmem:[#allocation4 + $0x1b8] sm:$0xff]
        %v1286 = vld [vmem:[#allocation4 + $0x1c0] sm:$0xff]
        %v1287 = vld [vmem:[#allocation4 + $0x1c8] sm:$0xff]
        %v1288 = vld [vmem:[#allocation4 + $0x1d0] sm:$0xff]
        %v1289 = vld [vmem:[#allocation4 + $0x1d8] sm:$0xff]
        %v1290 = vld [vmem:[#allocation4 + $0x1e0] sm:$0xff]
        %v1291 = vld [vmem:[#allocation4 + $0x1e8] sm:$0xff]
        %v1292 = vld [vmem:[#allocation4 + $0x1f0] sm:$0xff]
        %v1293 = vld [vmem:[#allocation4 + $0x1f8] sm:$0xff]
        %v1294 = vld [vmem:[#allocation4 + $0x200] sm:$0xff]
        %v1295 = vld [vmem:[#allocation4 + $0x208] sm:$0xff]
        %v1296 = vld [vmem:[#allocation4 + $0x210] sm:$0xff]
        %v1297 = vld [vmem:[#allocation4 + $0x218] sm:$0xff]
        %v1298 = vld [vmem:[#allocation4 + $0x220] sm:$0xff]
        %v1299 = vld [vmem:[#allocation4 + $0x228] sm:$0xff]
        %v1300 = vld [vmem:[#allocation4 + $0x230] sm:$0xff]
        %v1301 = vld [vmem:[#allocation4 + $0x238] sm:$0xff]
        %v1302 = vld [vmem:[#allocation4 + $0x240] sm:$0xff]
        %v1303 = vld [vmem:[#allocation4 + $0x248] sm:$0xff]
        %v1304 = vld [vmem:[#allocation4 + $0x250] sm:$0xff]
        %v1305 = vld [vmem:[#allocation4 + $0x258] sm:$0xff]
        %v1306 = vld [vmem:[#allocation4 + $0x260] sm:$0xff]
        %v1307 = vld [vmem:[#allocation4 + $0x268] sm:$0xff]
        %v1308 = vld [vmem:[#allocation4 + $0x270] sm:$0xff]
        %v1309 = vld [vmem:[#allocation4 + $0x278] sm:$0xff]
        %v1314 = vcombine.low %v1226, %v1227
        %v1315 = vcombine.low %v1228, %v1229
        %v1317 = vunpack.c.l.s4 1966171168
        %v1318 = vunpack.c.0.s8 %v1317
        %v1319 = vlaneseq
        %v1320 = vshrl.u32 %v1319, 7
        %v1321 = vsub.s32 %v1318, %v1320
        %v1322 = vrot.slane %v1314, %v1321
        %v1324 = vunpack.c.l.s4 1966171168
        %v1325 = vunpack.c.0.s8 %v1324
        %v1326 = vlaneseq
        %v1327 = vshrl.u32 %v1326, 7
        %v1328 = vsub.s32 %v1325, %v1327
        %v1329 = vrot.slane %v1315, %v1328
        %v1330 = vcombine.low %v1322, %v1329
        %v1332 = vunpack.c.l.s4 1966171168
        %v1333 = vunpack.c.0.s8 %v1332
        %v1334 = vlaneseq
        %v1335 = vshrl.u32 %v1334, 7
        %v1336 = vsub.s32 %v1333, %v1335
        %v1337 = vrot.slane %v1330, %v1336
        %1339 = vmatprep.subr.mxu0 %v1306
        %1340 = vmatpush1.msra.mxu0 %v1305
        %1341 = vmatprep.subr.mxu0 %v1301
        %1342 = vmatpush1.msra.mxu0 %v1300
        %1343 = vmatprep.subr.mxu0 %v1296
        %1344 = vmatpush1.msra.mxu0 %v1295
        %1345 = vmatprep.subr.mxu0 %v1291
        %1346 = vmatpush1.msra.mxu0 %v1290
        %1347 = vmatprep.subr.mxu0 %v1286
        %1348 = vmatpush1.msra.mxu0 %v1285
        %1349 = vmatprep.subr.mxu0 %v1281
        %1350 = vmatpush1.msra.mxu0 %v1280
        %1351 = vmatprep.subr.mxu0 %v1276
        %1352 = vmatpush1.msra.mxu0 %v1275
        %1353 = vmatprep.subr.mxu0 %v1271
        %1354 = vmatpush1.msra.mxu0 %v1270
        %1355 = vmatprep.subr.mxu0 %v1266
        %1356 = vmatpush1.msra.mxu0 %v1265
        %1357 = vmatprep.subr.mxu0 %v1261
        %1358 = vmatpush1.msra.mxu0 %v1260
        %1359 = vmatprep.subr.mxu0 %v1256
        %1360 = vmatpush1.msra.mxu0 %v1255
        %1361 = vmatprep.subr.mxu0 %v1251
        %1362 = vmatpush1.msra.mxu0 %v1250
        %1363 = vmatprep.subr.mxu0 %v1246
        %1364 = vmatpush1.msra.mxu0 %v1245
        %1365 = vmatprep.subr.mxu0 %v1241
        %1366 = vmatpush1.msra.mxu0 %v1240
        %1367 = vmatprep.subr.mxu0 %v1236
        %1368 = vmatpush1.msra.mxu0 %v1235
        %1369 = vmatprep.subr.mxu0 %v1231
        %1370 = vmatpush1.msra.mxu0 %v1230
        %1371 = vmatprep.subr.mxu0 0.0
        %1372 = vmatpush2.msra.mxu0 0.0
        %1373 = vmatprep.subr.mxu0 0.0
        %1374 = vmatpush2.msra.mxu0 0.0
        %1375 = vmatprep.subr.mxu0 0.0
        %1376 = vmatpush2.msra.mxu0 0.0
        %1377 = vmatprep.subr.mxu0 0.0
        %1378 = vmatpush2.msra.mxu0 0.0
        %1379 = vmatprep.subr.mxu0 0.0
        %1380 = vmatpush2.msra.mxu0 0.0
        %1381 = vmatprep.subr.mxu0 0.0
        %1382 = vmatpush2.msra.mxu0 0.0
        %1383 = vmatprep.subr.mxu0 0.0
        %1384 = vmatpush2.msra.mxu0 0.0
        %1385 = vmatprep.subr.mxu0 0.0
        %1386 = vmatpush2.msra.mxu0 0.0
        %1387 = vmatprep.subr.mxu0 0.0
        %1388 = vmatpush2.msra.mxu0 0.0
        %1389 = vmatprep.subr.mxu0 0.0
        %1390 = vmatpush2.msra.mxu0 0.0
        %1391 = vmatprep.subr.mxu0 0.0
        %1392 = vmatpush2.msra.mxu0 0.0
        %1393 = vmatprep.subr.mxu0 0.0
        %1394 = vmatpush2.msra.mxu0 0.0
        %1395 = vmatprep.subr.mxu0 0.0
        %1396 = vmatpush2.msra.mxu0 0.0
        %1397 = vmatprep.subr.mxu0 0.0
        %1398 = vmatpush2.msra.mxu0 0.0
        %1399 = vmatprep.subr.mxu0 0.0
        %1400 = vmatpush2.msra.mxu0 0.0
        %1401 = vmatprep.subr.mxu0 0.0
        %1402 = vmatpush2.msra.mxu0 0.0
        %1403 = vmatprep.mubr.f32.mxu0 0.0
        %1404 = vmatmul.mubr.f32.gmra.mxu0 %v1337
        %v1405 = vpop.f32.mrf.mxu0
        %v1406 = vadd.f32 0.0, %v1405
        %v1407 = vpop.f32.mrf.mxu0
        %v1408 = vadd.f32 0.0, %v1407
        %1409 = vdwg.mxu0
        %1410 = vmatprep.subr.mxu0 %v1308
        %1411 = vmatpush1.msra.mxu0 %v1307
        %1412 = vmatprep.subr.mxu0 %v1303
        %1413 = vmatpush1.msra.mxu0 %v1302
        %1414 = vmatprep.subr.mxu0 %v1298
        %1415 = vmatpush1.msra.mxu0 %v1297
        %1416 = vmatprep.subr.mxu0 %v1293
        %1417 = vmatpush1.msra.mxu0 %v1292
        %1418 = vmatprep.subr.mxu0 %v1288
        %1419 = vmatpush1.msra.mxu0 %v1287
        %1420 = vmatprep.subr.mxu0 %v1283
        %1421 = vmatpush1.msra.mxu0 %v1282
        %1422 = vmatprep.subr.mxu0 %v1278
        %1423 = vmatpush1.msra.mxu0 %v1277
        %1424 = vmatprep.subr.mxu0 %v1273
        %1425 = vmatpush1.msra.mxu0 %v1272
        %1426 = vmatprep.subr.mxu0 %v1268
        %1427 = vmatpush1.msra.mxu0 %v1267
        %1428 = vmatprep.subr.mxu0 %v1263
        %1429 = vmatpush1.msra.mxu0 %v1262
        %1430 = vmatprep.subr.mxu0 %v1258
        %1431 = vmatpush1.msra.mxu0 %v1257
        %1432 = vmatprep.subr.mxu0 %v1253
        %1433 = vmatpush1.msra.mxu0 %v1252
        %1434 = vmatprep.subr.mxu0 %v1248
        %1435 = vmatpush1.msra.mxu0 %v1247
        %1436 = vmatprep.subr.mxu0 %v1243
        %1437 = vmatpush1.msra.mxu0 %v1242
        %1438 = vmatprep.subr.mxu0 %v1238
        %1439 = vmatpush1.msra.mxu0 %v1237
        %1440 = vmatprep.subr.mxu0 %v1233
        %1441 = vmatpush1.msra.mxu0 %v1232
        %1442 = vmatprep.subr.mxu0 0.0
        %1443 = vmatpush2.msra.mxu0 0.0
        %1444 = vmatprep.subr.mxu0 0.0
        %1445 = vmatpush2.msra.mxu0 0.0
        %1446 = vmatprep.subr.mxu0 0.0
        %1447 = vmatpush2.msra.mxu0 0.0
        %1448 = vmatprep.subr.mxu0 0.0
        %1449 = vmatpush2.msra.mxu0 0.0
        %1450 = vmatprep.subr.mxu0 0.0
        %1451 = vmatpush2.msra.mxu0 0.0
        %1452 = vmatprep.subr.mxu0 0.0
        %1453 = vmatpush2.msra.mxu0 0.0
        %1454 = vmatprep.subr.mxu0 0.0
        %1455 = vmatpush2.msra.mxu0 0.0
        %1456 = vmatprep.subr.mxu0 0.0
        %1457 = vmatpush2.msra.mxu0 0.0
        %1458 = vmatprep.subr.mxu0 0.0
        %1459 = vmatpush2.msra.mxu0 0.0
        %1460 = vmatprep.subr.mxu0 0.0
        %1461 = vmatpush2.msra.mxu0 0.0
        %1462 = vmatprep.subr.mxu0 0.0
        %1463 = vmatpush2.msra.mxu0 0.0
        %1464 = vmatprep.subr.mxu0 0.0
        %1465 = vmatpush2.msra.mxu0 0.0
        %1466 = vmatprep.subr.mxu0 0.0
        %1467 = vmatpush2.msra.mxu0 0.0
        %1468 = vmatprep.subr.mxu0 0.0
        %1469 = vmatpush2.msra.mxu0 0.0
        %1470 = vmatprep.subr.mxu0 0.0
        %1471 = vmatpush2.msra.mxu0 0.0
        %1472 = vmatprep.subr.mxu0 0.0
        %1473 = vmatpush2.msra.mxu0 0.0
        %1474 = vmatprep.mubr.f32.mxu0 0.0
        %1475 = vmatmul.mubr.f32.gmra.mxu0 %v1337
        %v1476 = vpop.f32.mrf.mxu0
        %v1477 = vadd.f32 0.0, %v1476
        %v1478 = vpop.f32.mrf.mxu0
        %v1479 = vadd.f32 0.0, %v1478
        %1480 = vdwg.mxu0
        %1481 = vmatprep.subr.mxu0 0.0
        %1482 = vmatpush1.msra.mxu0 %v1309
        %1483 = vmatprep.subr.mxu0 0.0
        %1484 = vmatpush1.msra.mxu0 %v1304
        %1485 = vmatprep.subr.mxu0 0.0
        %1486 = vmatpush1.msra.mxu0 %v1299
        %1487 = vmatprep.subr.mxu0 0.0
        %1488 = vmatpush1.msra.mxu0 %v1294
        %1489 = vmatprep.subr.mxu0 0.0
        %1490 = vmatpush1.msra.mxu0 %v1289
        %1491 = vmatprep.subr.mxu0 0.0
        %1492 = vmatpush1.msra.mxu0 %v1284
        %1493 = vmatprep.subr.mxu0 0.0
        %1494 = vmatpush1.msra.mxu0 %v1279
        %1495 = vmatprep.subr.mxu0 0.0
        %1496 = vmatpush1.msra.mxu0 %v1274
        %1497 = vmatprep.subr.mxu0 0.0
        %1498 = vmatpush1.msra.mxu0 %v1269
        %1499 = vmatprep.subr.mxu0 0.0
        %1500 = vmatpush1.msra.mxu0 %v1264
        %1501 = vmatprep.subr.mxu0 0.0
        %1502 = vmatpush1.msra.mxu0 %v1259
        %1503 = vmatprep.subr.mxu0 0.0
        %1504 = vmatpush1.msra.mxu0 %v1254
        %1505 = vmatprep.subr.mxu0 0.0
        %1506 = vmatpush1.msra.mxu0 %v1249
        %1507 = vmatprep.subr.mxu0 0.0
        %1508 = vmatpush1.msra.mxu0 %v1244
        %1509 = vmatprep.subr.mxu0 0.0
        %1510 = vmatpush1.msra.mxu0 %v1239
        %1511 = vmatprep.subr.mxu0 0.0
        %1512 = vmatpush1.msra.mxu0 %v1234
        %1513 = vmatprep.subr.mxu0 0.0
        %1514 = vmatpush2.msra.mxu0 0.0
        %1515 = vmatprep.subr.mxu0 0.0
        %1516 = vmatpush2.msra.mxu0 0.0
        %1517 = vmatprep.subr.mxu0 0.0
        %1518 = vmatpush2.msra.mxu0 0.0
        %1519 = vmatprep.subr.mxu0 0.0
        %1520 = vmatpush2.msra.mxu0 0.0
        %1521 = vmatprep.subr.mxu0 0.0
        %1522 = vmatpush2.msra.mxu0 0.0
        %1523 = vmatprep.subr.mxu0 0.0
        %1524 = vmatpush2.msra.mxu0 0.0
        %1525 = vmatprep.subr.mxu0 0.0
        %1526 = vmatpush2.msra.mxu0 0.0
        %1527 = vmatprep.subr.mxu0 0.0
        %1528 = vmatpush2.msra.mxu0 0.0
        %1529 = vmatprep.subr.mxu0 0.0
        %1530 = vmatpush2.msra.mxu0 0.0
        %1531 = vmatprep.subr.mxu0 0.0
        %1532 = vmatpush2.msra.mxu0 0.0
        %1533 = vmatprep.subr.mxu0 0.0
        %1534 = vmatpush2.msra.mxu0 0.0
        %1535 = vmatprep.subr.mxu0 0.0
        %1536 = vmatpush2.msra.mxu0 0.0
        %1537 = vmatprep.subr.mxu0 0.0
        %1538 = vmatpush2.msra.mxu0 0.0
        %1539 = vmatprep.subr.mxu0 0.0
        %1540 = vmatpush2.msra.mxu0 0.0
        %1541 = vmatprep.subr.mxu0 0.0
        %1542 = vmatpush2.msra.mxu0 0.0
        %1543 = vmatprep.subr.mxu0 0.0
        %1544 = vmatpush2.msra.mxu0 0.0
        %1545 = vmatprep.mubr.f32.mxu0 0.0
        %1546 = vmatmul.mubr.f32.gmra.mxu0 %v1337
        %v1547 = vpop.f32.mrf.mxu0
        %v1548 = vadd.f32 0.0, %v1547
        %v1549 = vpop.f32.mrf.mxu0
        %1550 = vdwg.mxu0
        %v1551 = vld [vmem:[#allocation2] sm:$0xff]
        %v1552 = vld [vmem:[#allocation2 + $0x8] sm:$0xff]
        %v1553 = vld [vmem:[#allocation2 + $0x10] sm:$0xff]
        %v1554 = vld [vmem:[#allocation2 + $0x18] sm:$0xff]
        %v1555 = vld [vmem:[#allocation2 + $0x20] sm:$0xff]
        %v1556 = vld [vmem:[#allocation2 + $0x28] sm:$0xff]
        %vm1557 = vcmask 31744
        %v1559 = vsel %vm1557, %v1551, 0
        %vm1561 = vcmask 1043456
        %v1563 = vsel %vm1561, %v1406, 0
        %1565 = vmatprep.subr.mxu0 0.0
        %1566 = vmatpush1.msra.mxu0 0.0
        %1567 = vmatprep.subr.mxu0 0.0
        %1568 = vmatpush1.msra.mxu0 0.0
        %1569 = vmatprep.subr.mxu0 0.0
        %1570 = vmatpush1.msra.mxu0 0.0
        %1571 = vmatprep.subr.mxu0 0.0
        %1572 = vmatpush1.msra.mxu0 0.0
        %1573 = vmatprep.subr.mxu0 0.0
        %1574 = vmatpush1.msra.mxu0 0.0
        %1575 = vmatprep.subr.mxu0 0.0
        %1576 = vmatpush1.msra.mxu0 0.0
        %1577 = vmatprep.subr.mxu0 0.0
        %1578 = vmatpush1.msra.mxu0 0.0
        %1579 = vmatprep.subr.mxu0 0.0
        %1580 = vmatpush1.msra.mxu0 0.0
        %1581 = vmatprep.subr.mxu0 0.0
        %1582 = vmatpush1.msra.mxu0 0.0
        %1583 = vmatprep.subr.mxu0 0.0
        %1584 = vmatpush1.msra.mxu0 0.0
        %1585 = vmatprep.subr.mxu0 0.0
        %1586 = vmatpush1.msra.mxu0 0.0
        %1587 = vmatprep.subr.mxu0 0.0
        %1588 = vmatpush1.msra.mxu0 0.0
        %1589 = vmatprep.subr.mxu0 0.0
        %1590 = vmatpush1.msra.mxu0 0.0
        %1591 = vmatprep.subr.mxu0 0.0
        %1592 = vmatpush1.msra.mxu0 0.0
        %1593 = vmatprep.subr.mxu0 0.0
        %1594 = vmatpush1.msra.mxu0 0.0
        %1595 = vmatprep.subr.mxu0 0.0
        %1596 = vmatpush1.msra.mxu0 %v1563
        %1597 = vmatprep.subr.mxu0 0.0
        %1598 = vmatpush2.msra.mxu0 0.0
        %1599 = vmatprep.subr.mxu0 0.0
        %1600 = vmatpush2.msra.mxu0 0.0
        %1601 = vmatprep.subr.mxu0 0.0
        %1602 = vmatpush2.msra.mxu0 0.0
        %1603 = vmatprep.subr.mxu0 0.0
        %1604 = vmatpush2.msra.mxu0 0.0
        %1605 = vmatprep.subr.mxu0 0.0
        %1606 = vmatpush2.msra.mxu0 0.0
        %1607 = vmatprep.subr.mxu0 0.0
        %1608 = vmatpush2.msra.mxu0 0.0
        %1609 = vmatprep.subr.mxu0 0.0
        %1610 = vmatpush2.msra.mxu0 0.0
        %1611 = vmatprep.subr.mxu0 0.0
        %1612 = vmatpush2.msra.mxu0 0.0
        %1613 = vmatprep.subr.mxu0 0.0
        %1614 = vmatpush2.msra.mxu0 0.0
        %1615 = vmatprep.subr.mxu0 0.0
        %1616 = vmatpush2.msra.mxu0 0.0
        %1617 = vmatprep.subr.mxu0 0.0
        %1618 = vmatpush2.msra.mxu0 0.0
        %1619 = vmatprep.subr.mxu0 0.0
        %1620 = vmatpush2.msra.mxu0 0.0
        %1621 = vmatprep.subr.mxu0 0.0
        %1622 = vmatpush2.msra.mxu0 0.0
        %1623 = vmatprep.subr.mxu0 0.0
        %1624 = vmatpush2.msra.mxu0 0.0
        %1625 = vmatprep.subr.mxu0 0.0
        %1626 = vmatpush2.msra.mxu0 0.0
        %1627 = vmatprep.subr.mxu0 0.0
        %1628 = vmatpush2.msra.mxu0 0.0
        %1629 = vmatprep.mubr.f32.mxu0 0.0
        %1630 = vmatmul.mubr.f32.gmra.mxu0 %v1559
        %v1631 = vpop.f32.mrf.mxu0
        %v1632 = vadd.f32 0.0, %v1631
        %v1633 = vpop.f32.mrf.mxu0
        %1634 = vdwg.mxu0
        %v1636 = vsel %vm1557, %v1556, 0
        %v1638 = vsel %vm1561, %v1337, 0
        %1640 = vmatprep.subr.mxu0 0.0
        %1641 = vmatpush1.msra.mxu0 0.0
        %1642 = vmatprep.subr.mxu0 0.0
        %1643 = vmatpush1.msra.mxu0 0.0
        %1644 = vmatprep.subr.mxu0 0.0
        %1645 = vmatpush1.msra.mxu0 0.0
        %1646 = vmatprep.subr.mxu0 0.0
        %1647 = vmatpush1.msra.mxu0 0.0
        %1648 = vmatprep.subr.mxu0 0.0
        %1649 = vmatpush1.msra.mxu0 0.0
        %1650 = vmatprep.subr.mxu0 0.0
        %1651 = vmatpush1.msra.mxu0 0.0
        %1652 = vmatprep.subr.mxu0 0.0
        %1653 = vmatpush1.msra.mxu0 0.0
        %1654 = vmatprep.subr.mxu0 0.0
        %1655 = vmatpush1.msra.mxu0 0.0
        %1656 = vmatprep.subr.mxu0 0.0
        %1657 = vmatpush1.msra.mxu0 0.0
        %1658 = vmatprep.subr.mxu0 0.0
        %1659 = vmatpush1.msra.mxu0 0.0
        %1660 = vmatprep.subr.mxu0 0.0
        %1661 = vmatpush1.msra.mxu0 0.0
        %1662 = vmatprep.subr.mxu0 0.0
        %1663 = vmatpush1.msra.mxu0 0.0
        %1664 = vmatprep.subr.mxu0 0.0
        %1665 = vmatpush1.msra.mxu0 0.0
        %1666 = vmatprep.subr.mxu0 0.0
        %1667 = vmatpush1.msra.mxu0 0.0
        %1668 = vmatprep.subr.mxu0 0.0
        %1669 = vmatpush1.msra.mxu0 0.0
        %1670 = vmatprep.subr.mxu0 0.0
        %1671 = vmatpush1.msra.mxu0 %v1638
        %1672 = vmatprep.subr.mxu0 0.0
        %1673 = vmatpush2.msra.mxu0 0.0
        %1674 = vmatprep.subr.mxu0 0.0
        %1675 = vmatpush2.msra.mxu0 0.0
        %1676 = vmatprep.subr.mxu0 0.0
        %1677 = vmatpush2.msra.mxu0 0.0
        %1678 = vmatprep.subr.mxu0 0.0
        %1679 = vmatpush2.msra.mxu0 0.0
        %1680 = vmatprep.subr.mxu0 0.0
        %1681 = vmatpush2.msra.mxu0 0.0
        %1682 = vmatprep.subr.mxu0 0.0
        %1683 = vmatpush2.msra.mxu0 0.0
        %1684 = vmatprep.subr.mxu0 0.0
        %1685 = vmatpush2.msra.mxu0 0.0
        %1686 = vmatprep.subr.mxu0 0.0
        %1687 = vmatpush2.msra.mxu0 0.0
        %1688 = vmatprep.subr.mxu0 0.0
        %1689 = vmatpush2.msra.mxu0 0.0
        %1690 = vmatprep.subr.mxu0 0.0
        %1691 = vmatpush2.msra.mxu0 0.0
        %1692 = vmatprep.subr.mxu0 0.0
        %1693 = vmatpush2.msra.mxu0 0.0
        %1694 = vmatprep.subr.mxu0 0.0
        %1695 = vmatpush2.msra.mxu0 0.0
        %1696 = vmatprep.subr.mxu0 0.0
        %1697 = vmatpush2.msra.mxu0 0.0
        %1698 = vmatprep.subr.mxu0 0.0
        %1699 = vmatpush2.msra.mxu0 0.0
        %1700 = vmatprep.subr.mxu0 0.0
        %1701 = vmatpush2.msra.mxu0 0.0
        %1702 = vmatprep.subr.mxu0 0.0
        %1703 = vmatpush2.msra.mxu0 0.0
        %1704 = vmatprep.mubr.f32.mxu0 0.0
        %1705 = vmatmul.mubr.f32.gmra.mxu0 %v1636
        %v1706 = vpop.f32.mrf.mxu0
        %v1707 = vadd.f32 %v1632, %v1706
        %v1708 = vpop.f32.mrf.mxu0
        %1709 = vdwg.mxu0
        %v1711 = vsel %vm1557, %v1552, 0
        %v1714 = vsel %vm1561, %v1408, 0
        %1716 = vmatprep.subr.mxu0 0.0
        %1717 = vmatpush1.msra.mxu0 0.0
        %1718 = vmatprep.subr.mxu0 0.0
        %1719 = vmatpush1.msra.mxu0 0.0
        %1720 = vmatprep.subr.mxu0 0.0
        %1721 = vmatpush1.msra.mxu0 0.0
        %1722 = vmatprep.subr.mxu0 0.0
        %1723 = vmatpush1.msra.mxu0 0.0
        %1724 = vmatprep.subr.mxu0 0.0
        %1725 = vmatpush1.msra.mxu0 0.0
        %1726 = vmatprep.subr.mxu0 0.0
        %1727 = vmatpush1.msra.mxu0 0.0
        %1728 = vmatprep.subr.mxu0 0.0
        %1729 = vmatpush1.msra.mxu0 0.0
        %1730 = vmatprep.subr.mxu0 0.0
        %1731 = vmatpush1.msra.mxu0 0.0
        %1732 = vmatprep.subr.mxu0 0.0
        %1733 = vmatpush1.msra.mxu0 0.0
        %1734 = vmatprep.subr.mxu0 0.0
        %1735 = vmatpush1.msra.mxu0 0.0
        %1736 = vmatprep.subr.mxu0 0.0
        %1737 = vmatpush1.msra.mxu0 0.0
        %1738 = vmatprep.subr.mxu0 0.0
        %1739 = vmatpush1.msra.mxu0 0.0
        %1740 = vmatprep.subr.mxu0 0.0
        %1741 = vmatpush1.msra.mxu0 0.0
        %1742 = vmatprep.subr.mxu0 0.0
        %1743 = vmatpush1.msra.mxu0 0.0
        %1744 = vmatprep.subr.mxu0 0.0
        %1745 = vmatpush1.msra.mxu0 0.0
        %1746 = vmatprep.subr.mxu0 0.0
        %1747 = vmatpush1.msra.mxu0 %v1714
        %1748 = vmatprep.subr.mxu0 0.0
        %1749 = vmatpush2.msra.mxu0 0.0
        %1750 = vmatprep.subr.mxu0 0.0
        %1751 = vmatpush2.msra.mxu0 0.0
        %1752 = vmatprep.subr.mxu0 0.0
        %1753 = vmatpush2.msra.mxu0 0.0
        %1754 = vmatprep.subr.mxu0 0.0
        %1755 = vmatpush2.msra.mxu0 0.0
        %1756 = vmatprep.subr.mxu0 0.0
        %1757 = vmatpush2.msra.mxu0 0.0
        %1758 = vmatprep.subr.mxu0 0.0
        %1759 = vmatpush2.msra.mxu0 0.0
        %1760 = vmatprep.subr.mxu0 0.0
        %1761 = vmatpush2.msra.mxu0 0.0
        %1762 = vmatprep.subr.mxu0 0.0
        %1763 = vmatpush2.msra.mxu0 0.0
        %1764 = vmatprep.subr.mxu0 0.0
        %1765 = vmatpush2.msra.mxu0 0.0
        %1766 = vmatprep.subr.mxu0 0.0
        %1767 = vmatpush2.msra.mxu0 0.0
        %1768 = vmatprep.subr.mxu0 0.0
        %1769 = vmatpush2.msra.mxu0 0.0
        %1770 = vmatprep.subr.mxu0 0.0
        %1771 = vmatpush2.msra.mxu0 0.0
        %1772 = vmatprep.subr.mxu0 0.0
        %1773 = vmatpush2.msra.mxu0 0.0
        %1774 = vmatprep.subr.mxu0 0.0
        %1775 = vmatpush2.msra.mxu0 0.0
        %1776 = vmatprep.subr.mxu0 0.0
        %1777 = vmatpush2.msra.mxu0 0.0
        %1778 = vmatprep.subr.mxu0 0.0
        %1779 = vmatpush2.msra.mxu0 0.0
        %1780 = vmatprep.mubr.f32.mxu0 0.0
        %1781 = vmatmul.mubr.f32.gmra.mxu0 %v1711
        %v1782 = vpop.f32.mrf.mxu0
        %v1783 = vadd.f32 0.0, %v1782
        %v1784 = vpop.f32.mrf.mxu0
        %1785 = vdwg.mxu0
        %v1786 = vadd.f32 %v1707, %v1783
        %v1788 = vsel %vm1557, %v1553, 0
        %v1791 = vsel %vm1561, %v1477, 0
        %1793 = vmatprep.subr.mxu0 0.0
        %1794 = vmatpush1.msra.mxu0 0.0
        %1795 = vmatprep.subr.mxu0 0.0
        %1796 = vmatpush1.msra.mxu0 0.0
        %1797 = vmatprep.subr.mxu0 0.0
        %1798 = vmatpush1.msra.mxu0 0.0
        %1799 = vmatprep.subr.mxu0 0.0
        %1800 = vmatpush1.msra.mxu0 0.0
        %1801 = vmatprep.subr.mxu0 0.0
        %1802 = vmatpush1.msra.mxu0 0.0
        %1803 = vmatprep.subr.mxu0 0.0
        %1804 = vmatpush1.msra.mxu0 0.0
        %1805 = vmatprep.subr.mxu0 0.0
        %1806 = vmatpush1.msra.mxu0 0.0
        %1807 = vmatprep.subr.mxu0 0.0
        %1808 = vmatpush1.msra.mxu0 0.0
        %1809 = vmatprep.subr.mxu0 0.0
        %1810 = vmatpush1.msra.mxu0 0.0
        %1811 = vmatprep.subr.mxu0 0.0
        %1812 = vmatpush1.msra.mxu0 0.0
        %1813 = vmatprep.subr.mxu0 0.0
        %1814 = vmatpush1.msra.mxu0 0.0
        %1815 = vmatprep.subr.mxu0 0.0
        %1816 = vmatpush1.msra.mxu0 0.0
        %1817 = vmatprep.subr.mxu0 0.0
        %1818 = vmatpush1.msra.mxu0 0.0
        %1819 = vmatprep.subr.mxu0 0.0
        %1820 = vmatpush1.msra.mxu0 0.0
        %1821 = vmatprep.subr.mxu0 0.0
        %1822 = vmatpush1.msra.mxu0 0.0
        %1823 = vmatprep.subr.mxu0 0.0
        %1824 = vmatpush1.msra.mxu0 %v1791
        %1825 = vmatprep.subr.mxu0 0.0
        %1826 = vmatpush2.msra.mxu0 0.0
        %1827 = vmatprep.subr.mxu0 0.0
        %1828 = vmatpush2.msra.mxu0 0.0
        %1829 = vmatprep.subr.mxu0 0.0
        %1830 = vmatpush2.msra.mxu0 0.0
        %1831 = vmatprep.subr.mxu0 0.0
        %1832 = vmatpush2.msra.mxu0 0.0
        %1833 = vmatprep.subr.mxu0 0.0
        %1834 = vmatpush2.msra.mxu0 0.0
        %1835 = vmatprep.subr.mxu0 0.0
        %1836 = vmatpush2.msra.mxu0 0.0
        %1837 = vmatprep.subr.mxu0 0.0
        %1838 = vmatpush2.msra.mxu0 0.0
        %1839 = vmatprep.subr.mxu0 0.0
        %1840 = vmatpush2.msra.mxu0 0.0
        %1841 = vmatprep.subr.mxu0 0.0
        %1842 = vmatpush2.msra.mxu0 0.0
        %1843 = vmatprep.subr.mxu0 0.0
        %1844 = vmatpush2.msra.mxu0 0.0
        %1845 = vmatprep.subr.mxu0 0.0
        %1846 = vmatpush2.msra.mxu0 0.0
        %1847 = vmatprep.subr.mxu0 0.0
        %1848 = vmatpush2.msra.mxu0 0.0
        %1849 = vmatprep.subr.mxu0 0.0
        %1850 = vmatpush2.msra.mxu0 0.0
        %1851 = vmatprep.subr.mxu0 0.0
        %1852 = vmatpush2.msra.mxu0 0.0
        %1853 = vmatprep.subr.mxu0 0.0
        %1854 = vmatpush2.msra.mxu0 0.0
        %1855 = vmatprep.subr.mxu0 0.0
        %1856 = vmatpush2.msra.mxu0 0.0
        %1857 = vmatprep.mubr.f32.mxu0 0.0
        %1858 = vmatmul.mubr.f32.gmra.mxu0 %v1788
        %v1859 = vpop.f32.mrf.mxu0
        %v1860 = vadd.f32 0.0, %v1859
        %v1861 = vpop.f32.mrf.mxu0
        %1862 = vdwg.mxu0
        %v1863 = vadd.f32 %v1786, %v1860
        %v1865 = vsel %vm1557, %v1554, 0
        %v1868 = vsel %vm1561, %v1479, 0
        %1870 = vmatprep.subr.mxu0 0.0
        %1871 = vmatpush1.msra.mxu0 0.0
        %1872 = vmatprep.subr.mxu0 0.0
        %1873 = vmatpush1.msra.mxu0 0.0
        %1874 = vmatprep.subr.mxu0 0.0
        %1875 = vmatpush1.msra.mxu0 0.0
        %1876 = vmatprep.subr.mxu0 0.0
        %1877 = vmatpush1.msra.mxu0 0.0
        %1878 = vmatprep.subr.mxu0 0.0
        %1879 = vmatpush1.msra.mxu0 0.0
        %1880 = vmatprep.subr.mxu0 0.0
        %1881 = vmatpush1.msra.mxu0 0.0
        %1882 = vmatprep.subr.mxu0 0.0
        %1883 = vmatpush1.msra.mxu0 0.0
        %1884 = vmatprep.subr.mxu0 0.0
        %1885 = vmatpush1.msra.mxu0 0.0
        %1886 = vmatprep.subr.mxu0 0.0
        %1887 = vmatpush1.msra.mxu0 0.0
        %1888 = vmatprep.subr.mxu0 0.0
        %1889 = vmatpush1.msra.mxu0 0.0
        %1890 = vmatprep.subr.mxu0 0.0
        %1891 = vmatpush1.msra.mxu0 0.0
        %1892 = vmatprep.subr.mxu0 0.0
        %1893 = vmatpush1.msra.mxu0 0.0
        %1894 = vmatprep.subr.mxu0 0.0
        %1895 = vmatpush1.msra.mxu0 0.0
        %1896 = vmatprep.subr.mxu0 0.0
        %1897 = vmatpush1.msra.mxu0 0.0
        %1898 = vmatprep.subr.mxu0 0.0
        %1899 = vmatpush1.msra.mxu0 0.0
        %1900 = vmatprep.subr.mxu0 0.0
        %1901 = vmatpush1.msra.mxu0 %v1868
        %1902 = vmatprep.subr.mxu0 0.0
        %1903 = vmatpush2.msra.mxu0 0.0
        %1904 = vmatprep.subr.mxu0 0.0
        %1905 = vmatpush2.msra.mxu0 0.0
        %1906 = vmatprep.subr.mxu0 0.0
        %1907 = vmatpush2.msra.mxu0 0.0
        %1908 = vmatprep.subr.mxu0 0.0
        %1909 = vmatpush2.msra.mxu0 0.0
        %1910 = vmatprep.subr.mxu0 0.0
        %1911 = vmatpush2.msra.mxu0 0.0
        %1912 = vmatprep.subr.mxu0 0.0
        %1913 = vmatpush2.msra.mxu0 0.0
        %1914 = vmatprep.subr.mxu0 0.0
        %1915 = vmatpush2.msra.mxu0 0.0
        %1916 = vmatprep.subr.mxu0 0.0
        %1917 = vmatpush2.msra.mxu0 0.0
        %1918 = vmatprep.subr.mxu0 0.0
        %1919 = vmatpush2.msra.mxu0 0.0
        %1920 = vmatprep.subr.mxu0 0.0
        %1921 = vmatpush2.msra.mxu0 0.0
        %1922 = vmatprep.subr.mxu0 0.0
        %1923 = vmatpush2.msra.mxu0 0.0
        %1924 = vmatprep.subr.mxu0 0.0
        %1925 = vmatpush2.msra.mxu0 0.0
        %1926 = vmatprep.subr.mxu0 0.0
        %1927 = vmatpush2.msra.mxu0 0.0
        %1928 = vmatprep.subr.mxu0 0.0
        %1929 = vmatpush2.msra.mxu0 0.0
        %1930 = vmatprep.subr.mxu0 0.0
        %1931 = vmatpush2.msra.mxu0 0.0
        %1932 = vmatprep.subr.mxu0 0.0
        %1933 = vmatpush2.msra.mxu0 0.0
        %1934 = vmatprep.mubr.f32.mxu0 0.0
        %1935 = vmatmul.mubr.f32.gmra.mxu0 %v1865
        %v1936 = vpop.f32.mrf.mxu0
        %v1937 = vadd.f32 0.0, %v1936
        %v1938 = vpop.f32.mrf.mxu0
        %1939 = vdwg.mxu0
        %v1940 = vadd.f32 %v1863, %v1937
        %v1942 = vsel %vm1557, %v1555, 0
        %v1945 = vsel %vm1561, %v1548, 0
        %1947 = vmatprep.subr.mxu0 0.0
        %1948 = vmatpush1.msra.mxu0 0.0
        %1949 = vmatprep.subr.mxu0 0.0
        %1950 = vmatpush1.msra.mxu0 0.0
        %1951 = vmatprep.subr.mxu0 0.0
        %1952 = vmatpush1.msra.mxu0 0.0
        %1953 = vmatprep.subr.mxu0 0.0
        %1954 = vmatpush1.msra.mxu0 0.0
        %1955 = vmatprep.subr.mxu0 0.0
        %1956 = vmatpush1.msra.mxu0 0.0
        %1957 = vmatprep.subr.mxu0 0.0
        %1958 = vmatpush1.msra.mxu0 0.0
        %1959 = vmatprep.subr.mxu0 0.0
        %1960 = vmatpush1.msra.mxu0 0.0
        %1961 = vmatprep.subr.mxu0 0.0
        %1962 = vmatpush1.msra.mxu0 0.0
        %1963 = vmatprep.subr.mxu0 0.0
        %1964 = vmatpush1.msra.mxu0 0.0
        %1965 = vmatprep.subr.mxu0 0.0
        %1966 = vmatpush1.msra.mxu0 0.0
        %1967 = vmatprep.subr.mxu0 0.0
        %1968 = vmatpush1.msra.mxu0 0.0
        %1969 = vmatprep.subr.mxu0 0.0
        %1970 = vmatpush1.msra.mxu0 0.0
        %1971 = vmatprep.subr.mxu0 0.0
        %1972 = vmatpush1.msra.mxu0 0.0
        %1973 = vmatprep.subr.mxu0 0.0
        %1974 = vmatpush1.msra.mxu0 0.0
        %1975 = vmatprep.subr.mxu0 0.0
        %1976 = vmatpush1.msra.mxu0 0.0
        %1977 = vmatprep.subr.mxu0 0.0
        %1978 = vmatpush1.msra.mxu0 %v1945
        %1979 = vmatprep.subr.mxu0 0.0
        %1980 = vmatpush2.msra.mxu0 0.0
        %1981 = vmatprep.subr.mxu0 0.0
        %1982 = vmatpush2.msra.mxu0 0.0
        %1983 = vmatprep.subr.mxu0 0.0
        %1984 = vmatpush2.msra.mxu0 0.0
        %1985 = vmatprep.subr.mxu0 0.0
        %1986 = vmatpush2.msra.mxu0 0.0
        %1987 = vmatprep.subr.mxu0 0.0
        %1988 = vmatpush2.msra.mxu0 0.0
        %1989 = vmatprep.subr.mxu0 0.0
        %1990 = vmatpush2.msra.mxu0 0.0
        %1991 = vmatprep.subr.mxu0 0.0
        %1992 = vmatpush2.msra.mxu0 0.0
        %1993 = vmatprep.subr.mxu0 0.0
        %1994 = vmatpush2.msra.mxu0 0.0
        %1995 = vmatprep.subr.mxu0 0.0
        %1996 = vmatpush2.msra.mxu0 0.0
        %1997 = vmatprep.subr.mxu0 0.0
        %1998 = vmatpush2.msra.mxu0 0.0
        %1999 = vmatprep.subr.mxu0 0.0
        %2000 = vmatpush2.msra.mxu0 0.0
        %2001 = vmatprep.subr.mxu0 0.0
        %2002 = vmatpush2.msra.mxu0 0.0
        %2003 = vmatprep.subr.mxu0 0.0
        %2004 = vmatpush2.msra.mxu0 0.0
        %2005 = vmatprep.subr.mxu0 0.0
        %2006 = vmatpush2.msra.mxu0 0.0
        %2007 = vmatprep.subr.mxu0 0.0
        %2008 = vmatpush2.msra.mxu0 0.0
        %2009 = vmatprep.subr.mxu0 0.0
        %2010 = vmatpush2.msra.mxu0 0.0
        %2011 = vmatprep.mubr.f32.mxu0 0.0
        %2012 = vmatmul.mubr.f32.gmra.mxu0 %v1942
        %v2013 = vpop.f32.mrf.mxu0
        %v2014 = vadd.f32 0.0, %v2013
        %v2015 = vpop.f32.mrf.mxu0
        %2016 = vdwg.mxu0
        %v2017 = vadd.f32 %v1940, %v2014
        %v2018 = vld [vmem:[#allocation3] sm:$0xff]
        %2020 = vset.pattern.permute.xlu0 0
        %2021 = vperm.xlu0 %2020, %v2018
        %v2022 = vpop.permute.xlu0 %2021
        %v2024 = vadd.f32 %v2017, %v2022
        %v2025 = vmax.f32 %v2024, 0.0
        %v2027 = vcombine.high %v2025, %v2025
        %v2029 = vunpack.c.l.s4 1966171168
        %v2030 = vunpack.c.0.s8 %v2029
        %v2031 = vlaneseq
        %v2032 = vshrl.u32 %v2031, 7
        %v2033 = vsub.s32 %v2030, %v2032
        %v2034 = vrot.slane %v2025, %v2033
        %v2036 = vunpack.c.l.s4 1966171168
        %v2037 = vunpack.c.0.s8 %v2036
        %v2038 = vlaneseq
        %v2039 = vshrl.u32 %v2038, 7
        %v2040 = vsub.s32 %v2037, %v2039
        %v2041 = vrot.slane %v2027, %v2040
        %v2042 = vcombine.high %v2034, %v2034
        %v2043 = vcombine.high %v2041, %v2041
        %v2045 = vunpack.c.l.s4 1966171168
        %v2046 = vunpack.c.0.s8 %v2045
        %v2047 = vlaneseq
        %v2048 = vshrl.u32 %v2047, 7
        %v2049 = vsub.s32 %v2046, %v2048
        %v2050 = vrot.slane %v2034, %v2049
        %v2052 = vunpack.c.l.s4 1966171168
        %v2053 = vunpack.c.0.s8 %v2052
        %v2054 = vlaneseq
        %v2055 = vshrl.u32 %v2054, 7
        %v2056 = vsub.s32 %v2053, %v2055
        %v2057 = vrot.slane %v2041, %v2056
        %v2059 = vunpack.c.l.s4 1966171168
        %v2060 = vunpack.c.0.s8 %v2059
        %v2061 = vlaneseq
        %v2062 = vshrl.u32 %v2061, 7
        %v2063 = vsub.s32 %v2060, %v2062
        %v2064 = vrot.slane %v2042, %v2063
        %v2066 = vunpack.c.l.s4 1966171168
        %v2067 = vunpack.c.0.s8 %v2066
        %v2068 = vlaneseq
        %v2069 = vshrl.u32 %v2068, 7
        %v2070 = vsub.s32 %v2067, %v2069
        %v2071 = vrot.slane %v2043, %v2070
        %v2072 = vcombine.high %v2050, %v2050
        %v2073 = vcombine.high %v2057, %v2057
        %v2074 = vcombine.high %v2064, %v2064
        %v2075 = vcombine.high %v2071, %v2071
        %2084 = vst [vmem:[%s346] sm:$0x1] %v2050
        %2085 = vst [vmem:[%s346 + $0x1] sm:$0x1] %v2064
        %2086 = vst [vmem:[%s346 + $0x2] sm:$0x1] %v2072
        %2087 = vst [vmem:[%s346 + $0x3] sm:$0x1] %v2074
        %2088 = vst [vmem:[%s346 + $0x4] sm:$0x1] %v2057
        %2089 = vst [vmem:[%s346 + $0x5] sm:$0x1] %v2071
        %2090 = vst [vmem:[%s346 + $0x6] sm:$0x1] %v2073
        %2091 = vst [vmem:[%s346 + $0x7] sm:$0x1] %v2075
        %s2092 = sand.u32 %s225, 1
        %s2093 = scalar_lea.sflag [#allocation6], %s2092
        %s2094 = sand.u32 %s225, 1
        %s2095 = smul.addr %s2094, 8
        %s2096 = scalar_lea.vmem [#allocation7], %s2095
        // Predicated region
        $region61: #{tpu_custom_call.1} parent=51 // pred_check
          %p2097 = pneg %p235
        $region62: #{tpu_custom_call.1} parent=51 // pred_check_branch
          %2099 = sbr.rel (%p2097) target = $region64
        $region63: #{tpu_custom_call.1} parent=51 // pred_region
          %s2101 = ssub.s32 128, 128
          %2102 = vsyncadd %s2093, %s2101
          %s2103 = smul.addr %s27, 8
          %s2104 = sadd.s32 %s28, %s2103
          %s2105 = smul.addr %s2104, 16
          %s2106 = scalar_lea.hbm %s8, %s2105
          %s2107 = sshll.u32 %s2096, 4
          %s2108 = int_to_ptr.vmem [resolvable:$true] %s2107
          %2113 = dma.vmem_to_hbm [thread:$0]  %s2108, 128, %s2106, %s2093, 16, 16, 1
        $region64: #{tpu_custom_call.1} parent=51 // pred_fallthru
          _
      $region52: #{tpu_custom_call.1} parent=5 // pred_fallthru
        _
      %p2114 = scmp.le.s32.totalorder 2, %s18
      // Predicated region
      $region65: #{tpu_custom_call.1} parent=5 // pred_check
        %p2115 = pneg %p2114
      $region66: #{tpu_custom_call.1} parent=5 // pred_check_branch
        %2117 = sbr.rel (%p2115) target = $region68
      $region67: #{tpu_custom_call.1} parent=5 // pred_region
        %s2118 = ssub.s32 %s18, 2
        // Predicated region
        $region69: #{tpu_custom_call.1} parent=67 // pred_check
          %p2119 = pneg %p241
        $region70: #{tpu_custom_call.1} parent=67 // pred_check_branch
          %2121 = sbr.rel (%p2119) target = $region72
        $region71: #{tpu_custom_call.1} parent=67 // pred_region
          %s2122 = sand.u32 %s226, 1
          %s2123 = scalar_lea.sflag [#allocation6], %s2122
          %s2124 = sand.u32 %s226, 1
          %s2125 = smul.addr %s2124, 8
          %s2126 = scalar_lea.vmem [#allocation7], %s2125
          %2127 = dma.done %s2123, 128
        $region72: #{tpu_custom_call.1} parent=67 // pred_fallthru
          _
      $region68: #{tpu_custom_call.1} parent=5 // pred_fallthru
        _
    $region6: #{tpu_custom_call.1} parent=1 // loop_footer
      %s22 = sadd.s32 1, %s18
    $region7: #{tpu_custom_call.1} parent=1 // loop_footer_branch
      %17 = sbr.rel target = $region3
    $region8: #{tpu_custom_call.1} parent=1 // loop_exit
      _
    %2128 = vsyncpa [#allocation5], 1
    %s2129 = scalar_lea.sflag [#allocation5], 1
    %2130 = vsyncpa %s2129, 1
    %2131 = vsyncpa [#allocation6], 1
    %s2132 = scalar_lea.sflag [#allocation6], 1
    %2133 = vsyncpa %s2132, 1

</llo_original>
